<compile_context>
chip_gen: v5e
topology: v5e:2x2
jax: 0.10.0
libtpu: 0.0.40
codegen_flags: <defaults>
</compile_context>

<pallas_src>
import functools

import jax
import jax.numpy as jnp
from jax import lax
from jax.experimental import pallas as pl
from jax.experimental.pallas import tpu as pltpu


def _mha_flash_kernel(*refs, scale, n_head, n_hidden, has_mask, compute_dtype):
    if has_mask:
        (q_ref, k_ref, v_ref, wq_ref, wk_ref, wv_ref, wo_ref, mask_ref,
         o_ref, qh_s, m_s, l_s, acc_s) = refs
    else:
        (q_ref, k_ref, v_ref, wq_ref, wk_ref, wv_ref, wo_ref,
         o_ref, qh_s, m_s, l_s, acc_s) = refs
        mask_ref = None

    H, Dh = n_head, n_hidden
    ki = pl.program_id(2)
    nk = pl.num_programs(2)

    # ---- new (batch, q-tile): reset online-softmax state, project Q once (wide matmul).
    @pl.when(ki == 0)
    def _init():
        m_s[...] = jnp.full_like(m_s, -jnp.inf)
        l_s[...] = jnp.zeros_like(l_s)
        acc_s[...] = jnp.zeros_like(acc_s)
        qh = jnp.dot(q_ref[0], wq_ref[...], preferred_element_type=jnp.float32)
        qh_s[...] = qh.astype(qh_s.dtype)

    # ---- head-fused K/V projections for this k-tile: [tk, D] x [D, H*Dh].
    kh = jnp.dot(k_ref[0], wk_ref[...],
                 preferred_element_type=jnp.float32).astype(compute_dtype)
    vh = jnp.dot(v_ref[0], wv_ref[...],
                 preferred_element_type=jnp.float32).astype(compute_dtype)
    qh_all = qh_s[...]

    if has_mask:
        mask_blk = mask_ref[0]          # [Hm, tq, tk]  (Hm is 1 or H), fp32
        hm = mask_blk.shape[0]

    # ---- per-head online-softmax update (H statically unrolled, all 2-D ops).
    for h in range(H):
        qh_h = qh_all[:, h * Dh:(h + 1) * Dh]          # [tq, Dh]
        kh_h = kh[:, h * Dh:(h + 1) * Dh]              # [tk, Dh]
        vh_h = vh[:, h * Dh:(h + 1) * Dh]              # [tk, Dh]

        # Scores: contract the head dim directly (no materialized transpose of kh_h).
        s = lax.dot_general(qh_h, kh_h, (((1,), (1,)), ((), ())),
                            preferred_element_type=jnp.float32) * scale
        if has_mask:
            s = s + mask_blk[h if hm > 1 else 0]

        m_prev = m_s[h]                                            # [tq, 1]
        m_new = jnp.maximum(m_prev, jnp.max(s, axis=-1, keepdims=True))
        alpha = jnp.exp(m_prev - m_new)
        p = jnp.exp(s - m_new)                                     # [tq, tk] fp32
        l_s[h] = alpha * l_s[h] + jnp.sum(p, axis=-1, keepdims=True)
        acc_s[h] = alpha * acc_s[h] + jnp.dot(
            p.astype(compute_dtype), vh_h, preferred_element_type=jnp.float32)
        m_s[h] = m_new

    # ---- last k-tile: normalize, pack heads lane-dense, single output projection.
    @pl.when(ki == nk - 1)
    def _finalize():
        ctx = jnp.concatenate(
            [acc_s[h] * pl.reciprocal(l_s[h], approx=True) for h in range(H)],
            axis=-1)                                               # [tq, H*Dh] fp32
        out = jnp.dot(ctx.astype(compute_dtype), wo_ref[...],
                      preferred_element_type=jnp.float32)          # [tq, D]
        o_ref[0] = out.astype(o_ref.dtype)                         # written exactly once


def prepare_mha_params(params, n_hidden, n_head, compute_dtype=jnp.float32):
    """Permute PyTorch-layout weights into head-major slabs. Call ONCE at model init."""
    Dh, H = n_hidden, n_head
    D = params["wq"].shape[1]

    def fuse_in(w):  # (Dh*H, D) -> (D, H*Dh) with column index h*Dh + d
        return (jnp.asarray(w).T.reshape(D, Dh, H).transpose(0, 2, 1)
                .reshape(D, H * Dh).astype(compute_dtype))

    # FC: (D, Dh*H) with input index d*H + h -> (H*Dh, D) with row index h*Dh + d
    wo = (jnp.asarray(params["wo"]).T.reshape(Dh, H, D).transpose(1, 0, 2)
          .reshape(H * Dh, D).astype(compute_dtype))
    return {"wq": fuse_in(params["wq"]), "wk": fuse_in(params["wk"]),
            "wv": fuse_in(params["wv"]), "wo": wo}


def mha_attention(q, k, v, fused_params, n_hidden, n_head, mask=None, *,
                  block_q=256, block_k=256, compute_dtype=jnp.float32):
    """Pallas implementation of MHAttention.forward (fused_params from prepare_mha_params)."""
    B, L, D = q.shape
    Dh, H = n_hidden, n_head
    HD = H * Dh
    assert fused_params["wq"].shape == (D, HD)
    assert fused_params["wo"].shape == (HD, D)

    tq = min(block_q, L)
    tk = min(block_k, L)
    # TODO(synk): ragged sequence tiles (L not divisible by the tile size) are not masked yet.
    assert L % tq == 0 and (tq == L or tq % 8 == 0), "bad q tile"
    assert L % tk == 0 and (tk == L or tk % 8 == 0), "bad k tile"
    nq, nk = L // tq, L // tk

    cd = compute_dtype
    q = q.astype(cd)
    k = k.astype(cd)
    v = v.astype(cd)
    wq = fused_params["wq"].astype(cd)
    wk = fused_params["wk"].astype(cd)
    wv = fused_params["wv"].astype(cd)
    wo = fused_params["wo"].astype(cd)

    in_specs = [
        pl.BlockSpec((1, tq, D), lambda b, qi, ki: (b, qi, 0)),   # q tile
        pl.BlockSpec((1, tk, D), lambda b, qi, ki: (b, ki, 0)),   # k tile
        pl.BlockSpec((1, tk, D), lambda b, qi, ki: (b, ki, 0)),   # v tile
        pl.BlockSpec((D, HD), lambda b, qi, ki: (0, 0)),          # Wq (resident)
        pl.BlockSpec((D, HD), lambda b, qi, ki: (0, 0)),          # Wk (resident)
        pl.BlockSpec((D, HD), lambda b, qi, ki: (0, 0)),          # Wv (resident)
        pl.BlockSpec((HD, D), lambda b, qi, ki: (0, 0)),          # Wo (resident)
    ]
    operands = [q, k, v, wq, wk, wv, wo]

    has_mask = mask is not None
    if has_mask:
        m4 = jnp.asarray(mask, jnp.float32)
        assert m4.ndim <= 4, "mask must be broadcastable to (B, H, L, L)"
        m4 = m4.reshape((1,) * (4 - m4.ndim) + m4.shape)
        assert m4.shape[0] in (1, B) and m4.shape[1] in (1, H)
        m4 = jnp.broadcast_to(m4, m4.shape[:2] + (L, L))  # no batch/head broadcast in HBM
        Bm, Hm = m4.shape[0], m4.shape[1]
        assert tk == L or tk % 128 == 0, "mask tile last dim must be lane-aligned"
        in_specs.append(pl.BlockSpec(
            (1, Hm, tq, tk),
            lambda b, qi, ki: ((b if Bm > 1 else 0), 0, qi, ki)))
        operands.append(m4)

    kernel = functools.partial(
        _mha_flash_kernel, scale=float(Dh) ** -0.5, n_head=H, n_hidden=Dh,
        has_mask=has_mask, compute_dtype=cd)

    return pl.pallas_call(
        kernel,
        out_shape=jax.ShapeDtypeStruct((B, L, D), jnp.float32),
        grid_spec=pltpu.PrefetchScalarGridSpec(
            num_scalar_prefetch=0,
            grid=(B, nq, nk),
            in_specs=in_specs,
            out_specs=pl.BlockSpec((1, tq, D), lambda b, qi, ki: (b, qi, 0)),
            scratch_shapes=[
                pltpu.VMEM((tq, HD), cd),             # projected Q (per q-tile resident)
                pltpu.VMEM((H, tq, 1), jnp.float32),  # running max
                pltpu.VMEM((H, tq, 1), jnp.float32),  # running denominator
                pltpu.VMEM((H, tq, Dh), jnp.float32), # running context accumulator
            ]),
        compiler_params=pltpu.CompilerParams(
            dimension_semantics=("parallel", "parallel", "arbitrary"),
            vmem_limit_bytes=32 * 1024 * 1024),
    )(*operands)


def mha_reference(q, k, v, params, n_hidden, n_head, mask=None):
    """Pure-JAX reference matching the PyTorch forward semantics exactly."""
    B, L, _ = q.shape
    Q = (q @ params["wq"].T).reshape(B, L, n_hidden, n_head)
    K = (k @ params["wk"].T).reshape(B, L, n_hidden, n_head)
    V = (v @ params["wv"].T).reshape(B, L, n_hidden, n_head)
    x = jnp.einsum("bldh,bjdh->bhlj", Q, K) / (n_hidden ** 0.5)
    if mask is not None:
        x = x + mask
    x = jax.nn.softmax(x, axis=-1)
    x = jnp.einsum("bhlj,bjdh->bldh", x, V)
    x = x.reshape(B, L, n_hidden * n_head)
    return x @ params["wo"].T


if __name__ == "__main__":
    B, L = 2, 8
    d_model, n_hidden, n_head = 32, 8, 4

    key = jax.random.PRNGKey(0)
    kq, kk, kv, kwq, kwk, kwv, kwo, km = jax.random.split(key, 8)

    q = jax.random.normal(kq, (B, L, d_model), dtype=jnp.float32)
    k = jax.random.normal(kk, (B, L, d_model), dtype=jnp.float32)
    v = jax.random.normal(kv, (B, L, d_model), dtype=jnp.float32)

    # PyTorch nn.Linear weight shape: (out_features, in_features).
    params = {
        "wq": jax.random.normal(kwq, (n_hidden * n_head, d_model), jnp.float32) * 0.1,
        "wk": jax.random.normal(kwk, (n_hidden * n_head, d_model), jnp.float32) * 0.1,
        "wv": jax.random.normal(kwv, (n_hidden * n_head, d_model), jnp.float32) * 0.1,
        "wo": jax.random.normal(kwo, (d_model, n_head * n_hidden), jnp.float32) * 0.1,
    }

    # Weight permutation hoisted out of the forward path (done once here).
    fused_f32 = prepare_mha_params(params, n_hidden, n_head, jnp.float32)

    # fp32, no mask -> mask-free kernel variant (no zero-mask DMA).
    out = jax.block_until_ready(
        mha_attention(q, k, v, fused_f32, n_hidden, n_head, mask=None))
    ref = mha_reference(q, k, v, params, n_hidden, n_head, mask=None)
    assert out.shape == (B, L, d_model)
    assert jnp.allclose(out, ref, atol=1e-2, rtol=1e-2), "fp32 no-mask mismatch"

    # fp32 with an additive mask (streamed at its natural (1,1,L,L) extent).
    mask = jax.random.normal(km, (L, L), dtype=jnp.float32)
    out_m = jax.block_until_ready(
        mha_attention(q, k, v, fused_f32, n_hidden, n_head, mask=mask))
    ref_m = mha_reference(q, k, v, params, n_hidden, n_head, mask=mask)
    assert jnp.allclose(out_m, ref_m, atol=1e-2, rtol=1e-2), "fp32 masked mismatch"

    # bf16 MXU inputs / fp32 accumulation + fp32 softmax (v6e / v7x fast path).
    fused_bf16 = prepare_mha_params(params, n_hidden, n_head, jnp.bfloat16)
    out_bf = jax.block_until_ready(
        mha_attention(q, k, v, fused_bf16, n_hidden, n_head, mask=None,
                      compute_dtype=jnp.bfloat16))
    assert jnp.allclose(out_bf, ref, atol=1e-1, rtol=1e-1), "bf16 mismatch"

    print("KERNEL_OK")
</pallas_src>

<mosaic_0001>
module attributes {stable_mosaic.version = 11 : i64} {
  func.func @_mha_flash_kernel(%arg0: i32, %arg1: i32, %arg2: i32, %arg3: memref<1x8x32xf32, #tpu.memory_space<vmem>>, %arg4: memref<1x8x32xf32, #tpu.memory_space<vmem>>, %arg5: memref<1x8x32xf32, #tpu.memory_space<vmem>>, %arg6: memref<32x32xf32, #tpu.memory_space<vmem>>, %arg7: memref<32x32xf32, #tpu.memory_space<vmem>>, %arg8: memref<32x32xf32, #tpu.memory_space<vmem>>, %arg9: memref<32x32xf32, #tpu.memory_space<vmem>>, %arg10: memref<1x8x32xf32, #tpu.memory_space<vmem>>, %arg11: memref<8x32xf32, #tpu.memory_space<vmem>>, %arg12: memref<4x8x1xf32, #tpu.memory_space<vmem>>, %arg13: memref<4x8x1xf32, #tpu.memory_space<vmem>>, %arg14: memref<4x8x8xf32, #tpu.memory_space<vmem>>) attributes {dimension_semantics = [#tpu.dimension_semantics<parallel>, #tpu.dimension_semantics<parallel>, #tpu.dimension_semantics<arbitrary>], iteration_bounds = array<i64: 2, 1, 1>, scalar_prefetch = 0 : i64, scratch_operands = 4 : i64, tpu.core_type = #tpu.core_type<tc>, window_params = [{transform_indices = @transform_0, window_bounds = array<i64: 1, 8, 32>}, {transform_indices = @transform_1, window_bounds = array<i64: 1, 8, 32>}, {transform_indices = @transform_2, window_bounds = array<i64: 1, 8, 32>}, {pipeline_mode = #tpu.pipeline_mode<synchronous>, transform_indices = @transform_3, window_bounds = array<i64: 32, 32>}, {pipeline_mode = #tpu.pipeline_mode<synchronous>, transform_indices = @transform_4, window_bounds = array<i64: 32, 32>}, {pipeline_mode = #tpu.pipeline_mode<synchronous>, transform_indices = @transform_5, window_bounds = array<i64: 32, 32>}, {pipeline_mode = #tpu.pipeline_mode<synchronous>, transform_indices = @transform_6, window_bounds = array<i64: 32, 32>}, {transform_indices = @transform_7, window_bounds = array<i64: 1, 8, 32>}]} {
    %c0_i32 = arith.constant 0 : i32
    %0 = arith.cmpi eq, %arg2, %c0_i32 : i32
    %1 = arith.extui %0 : i1 to i32
    %c0_i32_0 = arith.constant 0 : i32
    %2 = arith.cmpi ne, %1, %c0_i32_0 : i32
    scf.if %2 {
      %cst_104 = arith.constant 0xFF800000 : f32
      %163 = vector.broadcast %cst_104 : f32 to vector<4x8x1xf32>
      %c0_105 = arith.constant 0 : index
      %c0_106 = arith.constant 0 : index
      %c0_107 = arith.constant 0 : index
      %164 = vector.load %arg12[%c0_105, %c0_106, %c0_107] : memref<4x8x1xf32, #tpu.memory_space<vmem>>, vector<4x8x1xf32>
      tpu.vector_store %arg12[%c0_105, %c0_106, %c0_107], %163 {strides = array<i32>} : memref<4x8x1xf32, #tpu.memory_space<vmem>>, vector<4x8x1xf32>,
      %cst_108 = arith.constant 0.000000e+00 : f32
      %165 = vector.broadcast %cst_108 : f32 to vector<4x8x1xf32>
      %c0_109 = arith.constant 0 : index
      %c0_110 = arith.constant 0 : index
      %c0_111 = arith.constant 0 : index
      %166 = vector.load %arg13[%c0_109, %c0_110, %c0_111] : memref<4x8x1xf32, #tpu.memory_space<vmem>>, vector<4x8x1xf32>
      tpu.vector_store %arg13[%c0_109, %c0_110, %c0_111], %165 {strides = array<i32>} : memref<4x8x1xf32, #tpu.memory_space<vmem>>, vector<4x8x1xf32>,
      %cst_112 = arith.constant 0.000000e+00 : f32
      %167 = vector.broadcast %cst_112 : f32 to vector<4x8x8xf32>
      %c0_113 = arith.constant 0 : index
      %c0_114 = arith.constant 0 : index
      %c0_115 = arith.constant 0 : index
      %168 = vector.load %arg14[%c0_113, %c0_114, %c0_115] : memref<4x8x8xf32, #tpu.memory_space<vmem>>, vector<4x8x8xf32>
      tpu.vector_store %arg14[%c0_113, %c0_114, %c0_115], %167 {strides = array<i32>} : memref<4x8x8xf32, #tpu.memory_space<vmem>>, vector<4x8x8xf32>,
      %c0_116 = arith.constant 0 : index
      %c0_117 = arith.constant 0 : index
      %c0_118 = arith.constant 0 : index
      %169 = vector.load %arg3[%c0_116, %c0_117, %c0_118] : memref<1x8x32xf32, #tpu.memory_space<vmem>>, vector<1x8x32xf32>
      %170 = vector.shape_cast %169 : vector<1x8x32xf32> to vector<8x32xf32>
      %c0_119 = arith.constant 0 : index
      %c0_120 = arith.constant 0 : index
      %171 = vector.load %arg6[%c0_119, %c0_120] : memref<32x32xf32, #tpu.memory_space<vmem>>, vector<32x32xf32>
      %cst_121 = arith.constant dense<0.000000e+00> : vector<8x32xf32>
      %172 = tpu.matmul %170, %171, %cst_121 {dimension_numbers = #tpu.dot_dimension_numbers<[1], [0], [0], [1], [0, 0, 1, 1], [], []>} : vector<8x32xf32>, vector<32x32xf32>, vector<8x32xf32> -> vector<8x32xf32>
      %c0_122 = arith.constant 0 : index
      %c0_123 = arith.constant 0 : index
      %173 = vector.load %arg11[%c0_122, %c0_123] : memref<8x32xf32, #tpu.memory_space<vmem>>, vector<8x32xf32>
      tpu.vector_store %arg11[%c0_122, %c0_123], %172 {strides = array<i32>} : memref<8x32xf32, #tpu.memory_space<vmem>>, vector<8x32xf32>,
    } else {
    }
    %c0 = arith.constant 0 : index
    %c0_1 = arith.constant 0 : index
    %c0_2 = arith.constant 0 : index
    %3 = vector.load %arg4[%c0, %c0_1, %c0_2] : memref<1x8x32xf32, #tpu.memory_space<vmem>>, vector<1x8x32xf32>
    %4 = vector.shape_cast %3 : vector<1x8x32xf32> to vector<8x32xf32>
    %c0_3 = arith.constant 0 : index
    %c0_4 = arith.constant 0 : index
    %5 = vector.load %arg7[%c0_3, %c0_4] : memref<32x32xf32, #tpu.memory_space<vmem>>, vector<32x32xf32>
    %cst = arith.constant dense<0.000000e+00> : vector<8x32xf32>
    %6 = tpu.matmul %4, %5, %cst {dimension_numbers = #tpu.dot_dimension_numbers<[1], [0], [0], [1], [0, 0, 1, 1], [], []>} : vector<8x32xf32>, vector<32x32xf32>, vector<8x32xf32> -> vector<8x32xf32>
    %c0_5 = arith.constant 0 : index
    %c0_6 = arith.constant 0 : index
    %c0_7 = arith.constant 0 : index
    %7 = vector.load %arg5[%c0_5, %c0_6, %c0_7] : memref<1x8x32xf32, #tpu.memory_space<vmem>>, vector<1x8x32xf32>
    %8 = vector.shape_cast %7 : vector<1x8x32xf32> to vector<8x32xf32>
    %c0_8 = arith.constant 0 : index
    %c0_9 = arith.constant 0 : index
    %9 = vector.load %arg8[%c0_8, %c0_9] : memref<32x32xf32, #tpu.memory_space<vmem>>, vector<32x32xf32>
    %cst_10 = arith.constant dense<0.000000e+00> : vector<8x32xf32>
    %10 = tpu.matmul %8, %9, %cst_10 {dimension_numbers = #tpu.dot_dimension_numbers<[1], [0], [0], [1], [0, 0, 1, 1], [], []>} : vector<8x32xf32>, vector<32x32xf32>, vector<8x32xf32> -> vector<8x32xf32>
    %c0_11 = arith.constant 0 : index
    %c0_12 = arith.constant 0 : index
    %11 = vector.load %arg11[%c0_11, %c0_12] : memref<8x32xf32, #tpu.memory_space<vmem>>, vector<8x32xf32>
    %12 = vector.extract_strided_slice %11 {offsets = [0, 0], sizes = [8, 8], strides = [1, 1]} : vector<8x32xf32> to vector<8x8xf32>
    %13 = vector.extract_strided_slice %6 {offsets = [0, 0], sizes = [8, 8], strides = [1, 1]} : vector<8x32xf32> to vector<8x8xf32>
    %14 = vector.extract_strided_slice %10 {offsets = [0, 0], sizes = [8, 8], strides = [1, 1]} : vector<8x32xf32> to vector<8x8xf32>
    %cst_13 = arith.constant dense<0.000000e+00> : vector<8x8xf32>
    %15 = tpu.matmul %12, %13, %cst_13 {dimension_numbers = #tpu.dot_dimension_numbers<[1], [1], [0], [0], [0, 0, 1, 0], [], []>} : vector<8x8xf32>, vector<8x8xf32>, vector<8x8xf32> -> vector<8x8xf32>
    %cst_14 = arith.constant 0.353553385 : f32
    %16 = vector.broadcast %cst_14 : f32 to vector<8x8xf32>
    %17 = arith.mulf %15, %16 : vector<8x8xf32>
    %c0_15 = arith.constant 0 : index
    %c0_16 = arith.constant 0 : index
    %c0_17 = arith.constant 0 : index
    %18 = vector.load %arg12[%c0_15, %c0_16, %c0_17] : memref<4x8x1xf32, #tpu.memory_space<vmem>>, vector<1x8x1xf32>
    %19 = vector.shape_cast %18 : vector<1x8x1xf32> to vector<8x1xf32>
    %cst_18 = arith.constant dense<0xFF800000> : vector<8xf32>
    %20 = vector.multi_reduction <maximumf>, %17, %cst_18 [1] : vector<8x8xf32> to vector<8xf32>
    %21 = vector.shape_cast %20 : vector<8xf32> to vector<8x1xf32>
    %22 = arith.maximumf %19, %21 : vector<8x1xf32>
    %23 = arith.subf %19, %22 : vector<8x1xf32>
    %24 = math.exp %23 : vector<8x1xf32>
    %25 = vector.broadcast %22 : vector<8x1xf32> to vector<8x8xf32>
    %26 = arith.subf %17, %25 : vector<8x8xf32>
    %27 = math.exp %26 : vector<8x8xf32>
    %c0_19 = arith.constant 0 : index
    %c0_20 = arith.constant 0 : index
    %c0_21 = arith.constant 0 : index
    %28 = vector.load %arg13[%c0_19, %c0_20, %c0_21] : memref<4x8x1xf32, #tpu.memory_space<vmem>>, vector<1x8x1xf32>
    %29 = vector.shape_cast %28 : vector<1x8x1xf32> to vector<8x1xf32>
    %30 = arith.mulf %24, %29 : vector<8x1xf32>
    %cst_22 = arith.constant dense<0.000000e+00> : vector<8xf32>
    %31 = vector.multi_reduction <add>, %27, %cst_22 [1] : vector<8x8xf32> to vector<8xf32>
    %32 = vector.shape_cast %31 : vector<8xf32> to vector<8x1xf32>
    %33 = arith.addf %30, %32 : vector<8x1xf32>
    %c0_23 = arith.constant 0 : index
    %c0_24 = arith.constant 0 : index
    %c0_25 = arith.constant 0 : index
    %34 = vector.load %arg13[%c0_23, %c0_24, %c0_25] : memref<4x8x1xf32, #tpu.memory_space<vmem>>, vector<1x8x1xf32>
    %35 = vector.shape_cast %34 : vector<1x8x1xf32> to vector<8x1xf32>
    %36 = vector.shape_cast %33 : vector<8x1xf32> to vector<1x8x1xf32>
    tpu.vector_store %arg13[%c0_23, %c0_24, %c0_25], %36 {strides = array<i32>} : memref<4x8x1xf32, #tpu.memory_space<vmem>>, vector<1x8x1xf32>,
    %c0_26 = arith.constant 0 : index
    %c0_27 = arith.constant 0 : index
    %c0_28 = arith.constant 0 : index
    %37 = vector.load %arg14[%c0_26, %c0_27, %c0_28] : memref<4x8x8xf32, #tpu.memory_space<vmem>>, vector<1x8x8xf32>
    %38 = vector.shape_cast %37 : vector<1x8x8xf32> to vector<8x8xf32>
    %39 = vector.broadcast %24 : vector<8x1xf32> to vector<8x8xf32>
    %40 = arith.mulf %39, %38 : vector<8x8xf32>
    %cst_29 = arith.constant dense<0.000000e+00> : vector<8x8xf32>
    %41 = tpu.matmul %27, %14, %cst_29 {dimension_numbers = #tpu.dot_dimension_numbers<[1], [0], [0], [1], [0, 0, 1, 1], [], []>} : vector<8x8xf32>, vector<8x8xf32>, vector<8x8xf32> -> vector<8x8xf32>
    %42 = arith.addf %40, %41 : vector<8x8xf32>
    %c0_30 = arith.constant 0 : index
    %c0_31 = arith.constant 0 : index
    %c0_32 = arith.constant 0 : index
    %43 = vector.load %arg14[%c0_30, %c0_31, %c0_32] : memref<4x8x8xf32, #tpu.memory_space<vmem>>, vector<1x8x8xf32>
    %44 = vector.shape_cast %43 : vector<1x8x8xf32> to vector<8x8xf32>
    %45 = vector.shape_cast %42 : vector<8x8xf32> to vector<1x8x8xf32>
    tpu.vector_store %arg14[%c0_30, %c0_31, %c0_32], %45 {strides = array<i32>} : memref<4x8x8xf32, #tpu.memory_space<vmem>>, vector<1x8x8xf32>,
    %c0_33 = arith.constant 0 : index
    %c0_34 = arith.constant 0 : index
    %c0_35 = arith.constant 0 : index
    %46 = vector.load %arg12[%c0_33, %c0_34, %c0_35] : memref<4x8x1xf32, #tpu.memory_space<vmem>>, vector<1x8x1xf32>
    %47 = vector.shape_cast %46 : vector<1x8x1xf32> to vector<8x1xf32>
    %48 = vector.shape_cast %22 : vector<8x1xf32> to vector<1x8x1xf32>
    tpu.vector_store %arg12[%c0_33, %c0_34, %c0_35], %48 {strides = array<i32>} : memref<4x8x1xf32, #tpu.memory_space<vmem>>, vector<1x8x1xf32>,
    %49 = vector.extract_strided_slice %11 {offsets = [0, 8], sizes = [8, 8], strides = [1, 1]} : vector<8x32xf32> to vector<8x8xf32>
    %50 = vector.extract_strided_slice %6 {offsets = [0, 8], sizes = [8, 8], strides = [1, 1]} : vector<8x32xf32> to vector<8x8xf32>
    %51 = vector.extract_strided_slice %10 {offsets = [0, 8], sizes = [8, 8], strides = [1, 1]} : vector<8x32xf32> to vector<8x8xf32>
    %cst_36 = arith.constant dense<0.000000e+00> : vector<8x8xf32>
    %52 = tpu.matmul %49, %50, %cst_36 {dimension_numbers = #tpu.dot_dimension_numbers<[1], [1], [0], [0], [0, 0, 1, 0], [], []>} : vector<8x8xf32>, vector<8x8xf32>, vector<8x8xf32> -> vector<8x8xf32>
    %cst_37 = arith.constant 0.353553385 : f32
    %53 = vector.broadcast %cst_37 : f32 to vector<8x8xf32>
    %54 = arith.mulf %52, %53 : vector<8x8xf32>
    %c1 = arith.constant 1 : index
    %c0_38 = arith.constant 0 : index
    %c0_39 = arith.constant 0 : index
    %55 = vector.load %arg12[%c1, %c0_38, %c0_39] : memref<4x8x1xf32, #tpu.memory_space<vmem>>, vector<1x8x1xf32>
    %56 = vector.shape_cast %55 : vector<1x8x1xf32> to vector<8x1xf32>
    %cst_40 = arith.constant dense<0xFF800000> : vector<8xf32>
    %57 = vector.multi_reduction <maximumf>, %54, %cst_40 [1] : vector<8x8xf32> to vector<8xf32>
    %58 = vector.shape_cast %57 : vector<8xf32> to vector<8x1xf32>
    %59 = arith.maximumf %56, %58 : vector<8x1xf32>
    %60 = arith.subf %56, %59 : vector<8x1xf32>
    %61 = math.exp %60 : vector<8x1xf32>
    %62 = vector.broadcast %59 : vector<8x1xf32> to vector<8x8xf32>
    %63 = arith.subf %54, %62 : vector<8x8xf32>
    %64 = math.exp %63 : vector<8x8xf32>
    %c1_41 = arith.constant 1 : index
    %c0_42 = arith.constant 0 : index
    %c0_43 = arith.constant 0 : index
    %65 = vector.load %arg13[%c1_41, %c0_42, %c0_43] : memref<4x8x1xf32, #tpu.memory_space<vmem>>, vector<1x8x1xf32>
    %66 = vector.shape_cast %65 : vector<1x8x1xf32> to vector<8x1xf32>
    %67 = arith.mulf %61, %66 : vector<8x1xf32>
    %cst_44 = arith.constant dense<0.000000e+00> : vector<8xf32>
    %68 = vector.multi_reduction <add>, %64, %cst_44 [1] : vector<8x8xf32> to vector<8xf32>
    %69 = vector.shape_cast %68 : vector<8xf32> to vector<8x1xf32>
    %70 = arith.addf %67, %69 : vector<8x1xf32>
    %c1_45 = arith.constant 1 : index
    %c0_46 = arith.constant 0 : index
    %c0_47 = arith.constant 0 : index
    %71 = vector.load %arg13[%c1_45, %c0_46, %c0_47] : memref<4x8x1xf32, #tpu.memory_space<vmem>>, vector<1x8x1xf32>
    %72 = vector.shape_cast %71 : vector<1x8x1xf32> to vector<8x1xf32>
    %73 = vector.shape_cast %70 : vector<8x1xf32> to vector<1x8x1xf32>
    tpu.vector_store %arg13[%c1_45, %c0_46, %c0_47], %73 {strides = array<i32>} : memref<4x8x1xf32, #tpu.memory_space<vmem>>, vector<1x8x1xf32>,
    %c1_48 = arith.constant 1 : index
    %c0_49 = arith.constant 0 : index
    %c0_50 = arith.constant 0 : index
    %74 = vector.load %arg14[%c1_48, %c0_49, %c0_50] : memref<4x8x8xf32, #tpu.memory_space<vmem>>, vector<1x8x8xf32>
    %75 = vector.shape_cast %74 : vector<1x8x8xf32> to vector<8x8xf32>
    %76 = vector.broadcast %61 : vector<8x1xf32> to vector<8x8xf32>
    %77 = arith.mulf %76, %75 : vector<8x8xf32>
    %cst_51 = arith.constant dense<0.000000e+00> : vector<8x8xf32>
    %78 = tpu.matmul %64, %51, %cst_51 {dimension_numbers = #tpu.dot_dimension_numbers<[1], [0], [0], [1], [0, 0, 1, 1], [], []>} : vector<8x8xf32>, vector<8x8xf32>, vector<8x8xf32> -> vector<8x8xf32>
    %79 = arith.addf %77, %78 : vector<8x8xf32>
    %c1_52 = arith.constant 1 : index
    %c0_53 = arith.constant 0 : index
    %c0_54 = arith.constant 0 : index
    %80 = vector.load %arg14[%c1_52, %c0_53, %c0_54] : memref<4x8x8xf32, #tpu.memory_space<vmem>>, vector<1x8x8xf32>
    %81 = vector.shape_cast %80 : vector<1x8x8xf32> to vector<8x8xf32>
    %82 = vector.shape_cast %79 : vector<8x8xf32> to vector<1x8x8xf32>
    tpu.vector_store %arg14[%c1_52, %c0_53, %c0_54], %82 {strides = array<i32>} : memref<4x8x8xf32, #tpu.memory_space<vmem>>, vector<1x8x8xf32>,
    %c1_55 = arith.constant 1 : index
    %c0_56 = arith.constant 0 : index
    %c0_57 = arith.constant 0 : index
    %83 = vector.load %arg12[%c1_55, %c0_56, %c0_57] : memref<4x8x1xf32, #tpu.memory_space<vmem>>, vector<1x8x1xf32>
    %84 = vector.shape_cast %83 : vector<1x8x1xf32> to vector<8x1xf32>
    %85 = vector.shape_cast %59 : vector<8x1xf32> to vector<1x8x1xf32>
    tpu.vector_store %arg12[%c1_55, %c0_56, %c0_57], %85 {strides = array<i32>} : memref<4x8x1xf32, #tpu.memory_space<vmem>>, vector<1x8x1xf32>,
    %86 = vector.extract_strided_slice %11 {offsets = [0, 16], sizes = [8, 8], strides = [1, 1]} : vector<8x32xf32> to vector<8x8xf32>
    %87 = vector.extract_strided_slice %6 {offsets = [0, 16], sizes = [8, 8], strides = [1, 1]} : vector<8x32xf32> to vector<8x8xf32>
    %88 = vector.extract_strided_slice %10 {offsets = [0, 16], sizes = [8, 8], strides = [1, 1]} : vector<8x32xf32> to vector<8x8xf32>
    %cst_58 = arith.constant dense<0.000000e+00> : vector<8x8xf32>
    %89 = tpu.matmul %86, %87, %cst_58 {dimension_numbers = #tpu.dot_dimension_numbers<[1], [1], [0], [0], [0, 0, 1, 0], [], []>} : vector<8x8xf32>, vector<8x8xf32>, vector<8x8xf32> -> vector<8x8xf32>
    %cst_59 = arith.constant 0.353553385 : f32
    %90 = vector.broadcast %cst_59 : f32 to vector<8x8xf32>
    %91 = arith.mulf %89, %90 : vector<8x8xf32>
    %c2 = arith.constant 2 : index
    %c0_60 = arith.constant 0 : index
    %c0_61 = arith.constant 0 : index
    %92 = vector.load %arg12[%c2, %c0_60, %c0_61] : memref<4x8x1xf32, #tpu.memory_space<vmem>>, vector<1x8x1xf32>
    %93 = vector.shape_cast %92 : vector<1x8x1xf32> to vector<8x1xf32>
    %cst_62 = arith.constant dense<0xFF800000> : vector<8xf32>
    %94 = vector.multi_reduction <maximumf>, %91, %cst_62 [1] : vector<8x8xf32> to vector<8xf32>
    %95 = vector.shape_cast %94 : vector<8xf32> to vector<8x1xf32>
    %96 = arith.maximumf %93, %95 : vector<8x1xf32>
    %97 = arith.subf %93, %96 : vector<8x1xf32>
    %98 = math.exp %97 : vector<8x1xf32>
    %99 = vector.broadcast %96 : vector<8x1xf32> to vector<8x8xf32>
    %100 = arith.subf %91, %99 : vector<8x8xf32>
    %101 = math.exp %100 : vector<8x8xf32>
    %c2_63 = arith.constant 2 : index
    %c0_64 = arith.constant 0 : index
    %c0_65 = arith.constant 0 : index
    %102 = vector.load %arg13[%c2_63, %c0_64, %c0_65] : memref<4x8x1xf32, #tpu.memory_space<vmem>>, vector<1x8x1xf32>
    %103 = vector.shape_cast %102 : vector<1x8x1xf32> to vector<8x1xf32>
    %104 = arith.mulf %98, %103 : vector<8x1xf32>
    %cst_66 = arith.constant dense<0.000000e+00> : vector<8xf32>
    %105 = vector.multi_reduction <add>, %101, %cst_66 [1] : vector<8x8xf32> to vector<8xf32>
    %106 = vector.shape_cast %105 : vector<8xf32> to vector<8x1xf32>
    %107 = arith.addf %104, %106 : vector<8x1xf32>
    %c2_67 = arith.constant 2 : index
    %c0_68 = arith.constant 0 : index
    %c0_69 = arith.constant 0 : index
    %108 = vector.load %arg13[%c2_67, %c0_68, %c0_69] : memref<4x8x1xf32, #tpu.memory_space<vmem>>, vector<1x8x1xf32>
    %109 = vector.shape_cast %108 : vector<1x8x1xf32> to vector<8x1xf32>
    %110 = vector.shape_cast %107 : vector<8x1xf32> to vector<1x8x1xf32>
    tpu.vector_store %arg13[%c2_67, %c0_68, %c0_69], %110 {strides = array<i32>} : memref<4x8x1xf32, #tpu.memory_space<vmem>>, vector<1x8x1xf32>,
    %c2_70 = arith.constant 2 : index
    %c0_71 = arith.constant 0 : index
    %c0_72 = arith.constant 0 : index
    %111 = vector.load %arg14[%c2_70, %c0_71, %c0_72] : memref<4x8x8xf32, #tpu.memory_space<vmem>>, vector<1x8x8xf32>
    %112 = vector.shape_cast %111 : vector<1x8x8xf32> to vector<8x8xf32>
    %113 = vector.broadcast %98 : vector<8x1xf32> to vector<8x8xf32>
    %114 = arith.mulf %113, %112 : vector<8x8xf32>
    %cst_73 = arith.constant dense<0.000000e+00> : vector<8x8xf32>
    %115 = tpu.matmul %101, %88, %cst_73 {dimension_numbers = #tpu.dot_dimension_numbers<[1], [0], [0], [1], [0, 0, 1, 1], [], []>} : vector<8x8xf32>, vector<8x8xf32>, vector<8x8xf32> -> vector<8x8xf32>
    %116 = arith.addf %114, %115 : vector<8x8xf32>
    %c2_74 = arith.constant 2 : index
    %c0_75 = arith.constant 0 : index
    %c0_76 = arith.constant 0 : index
    %117 = vector.load %arg14[%c2_74, %c0_75, %c0_76] : memref<4x8x8xf32, #tpu.memory_space<vmem>>, vector<1x8x8xf32>
    %118 = vector.shape_cast %117 : vector<1x8x8xf32> to vector<8x8xf32>
    %119 = vector.shape_cast %116 : vector<8x8xf32> to vector<1x8x8xf32>
    tpu.vector_store %arg14[%c2_74, %c0_75, %c0_76], %119 {strides = array<i32>} : memref<4x8x8xf32, #tpu.memory_space<vmem>>, vector<1x8x8xf32>,
    %c2_77 = arith.constant 2 : index
    %c0_78 = arith.constant 0 : index
    %c0_79 = arith.constant 0 : index
    %120 = vector.load %arg12[%c2_77, %c0_78, %c0_79] : memref<4x8x1xf32, #tpu.memory_space<vmem>>, vector<1x8x1xf32>
    %121 = vector.shape_cast %120 : vector<1x8x1xf32> to vector<8x1xf32>
    %122 = vector.shape_cast %96 : vector<8x1xf32> to vector<1x8x1xf32>
    tpu.vector_store %arg12[%c2_77, %c0_78, %c0_79], %122 {strides = array<i32>} : memref<4x8x1xf32, #tpu.memory_space<vmem>>, vector<1x8x1xf32>,
    %123 = vector.extract_strided_slice %11 {offsets = [0, 24], sizes = [8, 8], strides = [1, 1]} : vector<8x32xf32> to vector<8x8xf32>
    %124 = vector.extract_strided_slice %6 {offsets = [0, 24], sizes = [8, 8], strides = [1, 1]} : vector<8x32xf32> to vector<8x8xf32>
    %125 = vector.extract_strided_slice %10 {offsets = [0, 24], sizes = [8, 8], strides = [1, 1]} : vector<8x32xf32> to vector<8x8xf32>
    %cst_80 = arith.constant dense<0.000000e+00> : vector<8x8xf32>
    %126 = tpu.matmul %123, %124, %cst_80 {dimension_numbers = #tpu.dot_dimension_numbers<[1], [1], [0], [0], [0, 0, 1, 0], [], []>} : vector<8x8xf32>, vector<8x8xf32>, vector<8x8xf32> -> vector<8x8xf32>
    %cst_81 = arith.constant 0.353553385 : f32
    %127 = vector.broadcast %cst_81 : f32 to vector<8x8xf32>
    %128 = arith.mulf %126, %127 : vector<8x8xf32>
    %c3 = arith.constant 3 : index
    %c0_82 = arith.constant 0 : index
    %c0_83 = arith.constant 0 : index
    %129 = vector.load %arg12[%c3, %c0_82, %c0_83] : memref<4x8x1xf32, #tpu.memory_space<vmem>>, vector<1x8x1xf32>
    %130 = vector.shape_cast %129 : vector<1x8x1xf32> to vector<8x1xf32>
    %cst_84 = arith.constant dense<0xFF800000> : vector<8xf32>
    %131 = vector.multi_reduction <maximumf>, %128, %cst_84 [1] : vector<8x8xf32> to vector<8xf32>
    %132 = vector.shape_cast %131 : vector<8xf32> to vector<8x1xf32>
    %133 = arith.maximumf %130, %132 : vector<8x1xf32>
    %134 = arith.subf %130, %133 : vector<8x1xf32>
    %135 = math.exp %134 : vector<8x1xf32>
    %136 = vector.broadcast %133 : vector<8x1xf32> to vector<8x8xf32>
    %137 = arith.subf %128, %136 : vector<8x8xf32>
    %138 = math.exp %137 : vector<8x8xf32>
    %c3_85 = arith.constant 3 : index
    %c0_86 = arith.constant 0 : index
    %c0_87 = arith.constant 0 : index
    %139 = vector.load %arg13[%c3_85, %c0_86, %c0_87] : memref<4x8x1xf32, #tpu.memory_space<vmem>>, vector<1x8x1xf32>
    %140 = vector.shape_cast %139 : vector<1x8x1xf32> to vector<8x1xf32>
    %141 = arith.mulf %135, %140 : vector<8x1xf32>
    %cst_88 = arith.constant dense<0.000000e+00> : vector<8xf32>
    %142 = vector.multi_reduction <add>, %138, %cst_88 [1] : vector<8x8xf32> to vector<8xf32>
    %143 = vector.shape_cast %142 : vector<8xf32> to vector<8x1xf32>
    %144 = arith.addf %141, %143 : vector<8x1xf32>
    %c3_89 = arith.constant 3 : index
    %c0_90 = arith.constant 0 : index
    %c0_91 = arith.constant 0 : index
    %145 = vector.load %arg13[%c3_89, %c0_90, %c0_91] : memref<4x8x1xf32, #tpu.memory_space<vmem>>, vector<1x8x1xf32>
    %146 = vector.shape_cast %145 : vector<1x8x1xf32> to vector<8x1xf32>
    %147 = vector.shape_cast %144 : vector<8x1xf32> to vector<1x8x1xf32>
    tpu.vector_store %arg13[%c3_89, %c0_90, %c0_91], %147 {strides = array<i32>} : memref<4x8x1xf32, #tpu.memory_space<vmem>>, vector<1x8x1xf32>,
    %c3_92 = arith.constant 3 : index
    %c0_93 = arith.constant 0 : index
    %c0_94 = arith.constant 0 : index
    %148 = vector.load %arg14[%c3_92, %c0_93, %c0_94] : memref<4x8x8xf32, #tpu.memory_space<vmem>>, vector<1x8x8xf32>
    %149 = vector.shape_cast %148 : vector<1x8x8xf32> to vector<8x8xf32>
    %150 = vector.broadcast %135 : vector<8x1xf32> to vector<8x8xf32>
    %151 = arith.mulf %150, %149 : vector<8x8xf32>
    %cst_95 = arith.constant dense<0.000000e+00> : vector<8x8xf32>
    %152 = tpu.matmul %138, %125, %cst_95 {dimension_numbers = #tpu.dot_dimension_numbers<[1], [0], [0], [1], [0, 0, 1, 1], [], []>} : vector<8x8xf32>, vector<8x8xf32>, vector<8x8xf32> -> vector<8x8xf32>
    %153 = arith.addf %151, %152 : vector<8x8xf32>
    %c3_96 = arith.constant 3 : index
    %c0_97 = arith.constant 0 : index
    %c0_98 = arith.constant 0 : index
    %154 = vector.load %arg14[%c3_96, %c0_97, %c0_98] : memref<4x8x8xf32, #tpu.memory_space<vmem>>, vector<1x8x8xf32>
    %155 = vector.shape_cast %154 : vector<1x8x8xf32> to vector<8x8xf32>
    %156 = vector.shape_cast %153 : vector<8x8xf32> to vector<1x8x8xf32>
    tpu.vector_store %arg14[%c3_96, %c0_97, %c0_98], %156 {strides = array<i32>} : memref<4x8x8xf32, #tpu.memory_space<vmem>>, vector<1x8x8xf32>,
    %c3_99 = arith.constant 3 : index
    %c0_100 = arith.constant 0 : index
    %c0_101 = arith.constant 0 : index
    %157 = vector.load %arg12[%c3_99, %c0_100, %c0_101] : memref<4x8x1xf32, #tpu.memory_space<vmem>>, vector<1x8x1xf32>
    %158 = vector.shape_cast %157 : vector<1x8x1xf32> to vector<8x1xf32>
    %159 = vector.shape_cast %133 : vector<8x1xf32> to vector<1x8x1xf32>
    tpu.vector_store %arg12[%c3_99, %c0_100, %c0_101], %159 {strides = array<i32>} : memref<4x8x1xf32, #tpu.memory_space<vmem>>, vector<1x8x1xf32>,
    %c0_i32_102 = arith.constant 0 : i32
    %160 = arith.cmpi eq, %arg2, %c0_i32_102 : i32
    %161 = arith.extui %160 : i1 to i32
    %c0_i32_103 = arith.constant 0 : i32
    %162 = arith.cmpi ne, %161, %c0_i32_103 : i32
    scf.if %162 {
      %c0_104 = arith.constant 0 : index
      %c0_105 = arith.constant 0 : index
      %c0_106 = arith.constant 0 : index
      %163 = vector.load %arg14[%c0_104, %c0_105, %c0_106] : memref<4x8x8xf32, #tpu.memory_space<vmem>>, vector<1x8x8xf32>
      %164 = vector.shape_cast %163 : vector<1x8x8xf32> to vector<8x8xf32>
      %c0_107 = arith.constant 0 : index
      %c0_108 = arith.constant 0 : index
      %c0_109 = arith.constant 0 : index
      %165 = vector.load %arg13[%c0_107, %c0_108, %c0_109] : memref<4x8x1xf32, #tpu.memory_space<vmem>>, vector<1x8x1xf32>
      %166 = vector.shape_cast %165 : vector<1x8x1xf32> to vector<8x1xf32>
      %167 = tpu.reciprocal %166 {approx = true} : vector<8x1xf32> -> vector<8x1xf32>
      %168 = vector.broadcast %167 : vector<8x1xf32> to vector<8x8xf32>
      %169 = arith.mulf %164, %168 : vector<8x8xf32>
      %c1_110 = arith.constant 1 : index
      %c0_111 = arith.constant 0 : index
      %c0_112 = arith.constant 0 : index
      %170 = vector.load %arg14[%c1_110, %c0_111, %c0_112] : memref<4x8x8xf32, #tpu.memory_space<vmem>>, vector<1x8x8xf32>
      %171 = vector.shape_cast %170 : vector<1x8x8xf32> to vector<8x8xf32>
      %c1_113 = arith.constant 1 : index
      %c0_114 = arith.constant 0 : index
      %c0_115 = arith.constant 0 : index
      %172 = vector.load %arg13[%c1_113, %c0_114, %c0_115] : memref<4x8x1xf32, #tpu.memory_space<vmem>>, vector<1x8x1xf32>
      %173 = vector.shape_cast %172 : vector<1x8x1xf32> to vector<8x1xf32>
      %174 = tpu.reciprocal %173 {approx = true} : vector<8x1xf32> -> vector<8x1xf32>
      %175 = vector.broadcast %174 : vector<8x1xf32> to vector<8x8xf32>
      %176 = arith.mulf %171, %175 : vector<8x8xf32>
      %c2_116 = arith.constant 2 : index
      %c0_117 = arith.constant 0 : index
      %c0_118 = arith.constant 0 : index
      %177 = vector.load %arg14[%c2_116, %c0_117, %c0_118] : memref<4x8x8xf32, #tpu.memory_space<vmem>>, vector<1x8x8xf32>
      %178 = vector.shape_cast %177 : vector<1x8x8xf32> to vector<8x8xf32>
      %c2_119 = arith.constant 2 : index
      %c0_120 = arith.constant 0 : index
      %c0_121 = arith.constant 0 : index
      %179 = vector.load %arg13[%c2_119, %c0_120, %c0_121] : memref<4x8x1xf32, #tpu.memory_space<vmem>>, vector<1x8x1xf32>
      %180 = vector.shape_cast %179 : vector<1x8x1xf32> to vector<8x1xf32>
      %181 = tpu.reciprocal %180 {approx = true} : vector<8x1xf32> -> vector<8x1xf32>
      %182 = vector.broadcast %181 : vector<8x1xf32> to vector<8x8xf32>
      %183 = arith.mulf %178, %182 : vector<8x8xf32>
      %c3_122 = arith.constant 3 : index
      %c0_123 = arith.constant 0 : index
      %c0_124 = arith.constant 0 : index
      %184 = vector.load %arg14[%c3_122, %c0_123, %c0_124] : memref<4x8x8xf32, #tpu.memory_space<vmem>>, vector<1x8x8xf32>
      %185 = vector.shape_cast %184 : vector<1x8x8xf32> to vector<8x8xf32>
      %c3_125 = arith.constant 3 : index
      %c0_126 = arith.constant 0 : index
      %c0_127 = arith.constant 0 : index
      %186 = vector.load %arg13[%c3_125, %c0_126, %c0_127] : memref<4x8x1xf32, #tpu.memory_space<vmem>>, vector<1x8x1xf32>
      %187 = vector.shape_cast %186 : vector<1x8x1xf32> to vector<8x1xf32>
      %188 = tpu.reciprocal %187 {approx = true} : vector<8x1xf32> -> vector<8x1xf32>
      %189 = vector.broadcast %188 : vector<8x1xf32> to vector<8x8xf32>
      %190 = arith.mulf %185, %189 : vector<8x8xf32>
      %191 = tpu.concatenate %169, %176, %183, %190 in 1 : vector<8x8xf32>, vector<8x8xf32>, vector<8x8xf32>, vector<8x8xf32> -> vector<8x32xf32>
      %c0_128 = arith.constant 0 : index
      %c0_129 = arith.constant 0 : index
      %192 = vector.load %arg9[%c0_128, %c0_129] : memref<32x32xf32, #tpu.memory_space<vmem>>, vector<32x32xf32>
      %cst_130 = arith.constant dense<0.000000e+00> : vector<8x32xf32>
      %193 = tpu.matmul %191, %192, %cst_130 {dimension_numbers = #tpu.dot_dimension_numbers<[1], [0], [0], [1], [0, 0, 1, 1], [], []>} : vector<8x32xf32>, vector<32x32xf32>, vector<8x32xf32> -> vector<8x32xf32>
      %c0_131 = arith.constant 0 : index
      %c0_132 = arith.constant 0 : index
      %c0_133 = arith.constant 0 : index
      %194 = vector.load %arg10[%c0_131, %c0_132, %c0_133] : memref<1x8x32xf32, #tpu.memory_space<vmem>>, vector<1x8x32xf32>
      %195 = vector.shape_cast %194 : vector<1x8x32xf32> to vector<8x32xf32>
      %196 = vector.shape_cast %193 : vector<8x32xf32> to vector<1x8x32xf32>
      tpu.vector_store %arg10[%c0_131, %c0_132, %c0_133], %196 {strides = array<i32>} : memref<1x8x32xf32, #tpu.memory_space<vmem>>, vector<1x8x32xf32>,
    } else {
    }
    return
  }
  func.func @transform_0(%arg0: i32, %arg1: i32, %arg2: i32) -> (i32, i32, i32) {
    %c0_i32 = arith.constant 0 : i32
    %c0_i32_0 = arith.constant 0 : i32
    return %arg0, %arg1, %c0_i32 : i32, i32, i32
  }
  func.func @transform_1(%arg0: i32, %arg1: i32, %arg2: i32) -> (i32, i32, i32) {
    %c0_i32 = arith.constant 0 : i32
    %c0_i32_0 = arith.constant 0 : i32
    return %arg0, %arg2, %c0_i32 : i32, i32, i32
  }
  func.func @transform_2(%arg0: i32, %arg1: i32, %arg2: i32) -> (i32, i32, i32) {
    %c0_i32 = arith.constant 0 : i32
    %c0_i32_0 = arith.constant 0 : i32
    return %arg0, %arg2, %c0_i32 : i32, i32, i32
  }
  func.func @transform_3(%arg0: i32, %arg1: i32, %arg2: i32) -> (i32, i32) {
    %c0_i32 = arith.constant 0 : i32
    %c0_i32_0 = arith.constant 0 : i32
    %c0_i32_1 = arith.constant 0 : i32
    return %c0_i32, %c0_i32_0 : i32, i32
  }
  func.func @transform_4(%arg0: i32, %arg1: i32, %arg2: i32) -> (i32, i32) {
    %c0_i32 = arith.constant 0 : i32
    %c0_i32_0 = arith.constant 0 : i32
    %c0_i32_1 = arith.constant 0 : i32
    return %c0_i32, %c0_i32_0 : i32, i32
  }
  func.func @transform_5(%arg0: i32, %arg1: i32, %arg2: i32) -> (i32, i32) {
    %c0_i32 = arith.constant 0 : i32
    %c0_i32_0 = arith.constant 0 : i32
    %c0_i32_1 = arith.constant 0 : i32
    return %c0_i32, %c0_i32_0 : i32, i32
  }
  func.func @transform_6(%arg0: i32, %arg1: i32, %arg2: i32) -> (i32, i32) {
    %c0_i32 = arith.constant 0 : i32
    %c0_i32_0 = arith.constant 0 : i32
    %c0_i32_1 = arith.constant 0 : i32
    return %c0_i32, %c0_i32_0 : i32, i32
  }
  func.func @transform_7(%arg0: i32, %arg1: i32, %arg2: i32) -> (i32, i32, i32) {
    %c0_i32 = arith.constant 0 : i32
    %c0_i32_0 = arith.constant 0 : i32
    return %arg0, %arg1, %c0_i32 : i32, i32, i32
  }
}

</mosaic_0001>

<llo_original>
// kernel: tpu_custom_call.1
$region0: #{tpu_custom_call.1}
  #allocation0 [shape = 'u32[]', space=smem, size = 0x4, offset = 0x4, fixed_abs, tag = 'smem constant byte address 0x4 - core index']
  #allocation1 [shape = 'u32[72,128]{1,0:T(1,128)}', space=vmem, size = 0x9000, scoped, tag = 'internal scratch']
  #allocation2 [shape = 'f32[8,32]{1,0:T(8,128)}', space=vmem, size = 0x1000, scoped, tag = 'scratch operand']
  #allocation3 [shape = 'f32[4,8,1]{2,1,0:T(8,128)}', space=vmem, size = 0x4000, scoped, tag = 'scratch operand']
  #allocation4 [shape = 'f32[4,8,1]{2,1,0:T(8,128)}', space=vmem, size = 0x4000, scoped, tag = 'scratch operand']
  #allocation5 [shape = 'f32[4,8,8]{2,1,0:T(8,128)}', space=vmem, size = 0x4000, scoped, tag = 'scratch operand']
  %s0 = inlined_call_operand.hbm [shape: f32[2,8,32], index: 0, kind: input, shape index: {}]
  %s1 = inlined_call_operand.hbm [shape: f32[2,8,32], index: 1, kind: input, shape index: {}]
  %s2 = inlined_call_operand.hbm [shape: f32[2,8,32], index: 2, kind: input, shape index: {}]
  %s3 = inlined_call_operand.hbm [shape: f32[32,32], index: 3, kind: input, shape index: {}]
  %s4 = inlined_call_operand.hbm [shape: f32[32,32], index: 4, kind: input, shape index: {}]
  %s5 = inlined_call_operand.hbm [shape: f32[32,32], index: 5, kind: input, shape index: {}]
  %s6 = inlined_call_operand.hbm [shape: f32[32,32], index: 6, kind: input, shape index: {}]
  %s7 = inlined_call_operand.hbm [shape: f32[2,8,32], index: 7, kind: output, shape index: {}]
  %s8 = sld [smem:[#allocation0]]
  $region97: #{tpu_custom_call.1} parent=0
    _
  %s10 = ssub.s32 1, %s8
  %s11 = scalar_select 0, %s10, %s8
  $region1: #{tpu_custom_call.1} parent=0
    #allocation6 [shape = 'u8[8192]{0}', space=vmem, size = 0x2000, scoped, tag = 'input window, operand 0']
    #allocation7 [shape = 's32[2]{0}', space=sflag, size = 0x8, scoped, tag = 'scoped memory for tpu_custom_call.1']
    #allocation8 [shape = 's32[2]{0}', space=sflag, size = 0x8, scoped, tag = 'scoped memory for tpu_custom_call.1']
    #allocation9 [shape = 'u8[8192]{0}', space=vmem, size = 0x2000, scoped, tag = 'input window, operand 1']
    #allocation10 [shape = 's32[2]{0}', space=sflag, size = 0x8, scoped, tag = 'scoped memory for tpu_custom_call.1']
    #allocation11 [shape = 'u8[8192]{0}', space=vmem, size = 0x2000, scoped, tag = 'input window, operand 2']
    #allocation12 [shape = 'u8[16384]{0}', space=vmem, size = 0x4000, scoped, tag = 'input window, operand 3, single buffered']
    #allocation13 [shape = 's32[1]{0}', space=sflag, size = 0x4, scoped, tag = 'scoped memory for tpu_custom_call.1']
    #allocation14 [shape = 'u8[16384]{0}', space=vmem, size = 0x4000, scoped, tag = 'input window, operand 4, single buffered']
    #allocation15 [shape = 'u8[16384]{0}', space=vmem, size = 0x4000, scoped, tag = 'input window, operand 5, single buffered']
    #allocation16 [shape = 's32[1]{0}', space=sflag, size = 0x4, scoped, tag = 'scoped memory for tpu_custom_call.1']
    #allocation17 [shape = 'u8[16384]{0}', space=vmem, size = 0x4000, scoped, tag = 'input window, operand 6, single buffered']
    #allocation18 [shape = 'u8[8192]{0}', space=vmem, size = 0x2000, scoped, tag = 'output window, operand 0']
    %12 = vsyncpa [#allocation7], 0
    %s13 = scalar_lea.sflag [#allocation7], 1
    %14 = vsyncpa %s13, 0
    %15 = vsyncpa [#allocation10], 0
    %s16 = scalar_lea.sflag [#allocation10], 1
    %17 = vsyncpa %s16, 0
    %18 = vsyncpa [#allocation13], 0
    %19 = vsyncpa [#allocation16], 0
    %20 = vsyncpa [#allocation8], 0
    %s21 = scalar_lea.sflag [#allocation8], 1
    %22 = vsyncpa %s21, 0
    loop: start=0, step=1, limit=4
    $region2: #{tpu_custom_call.1} parent=1 // loop_pre_header
      _
    $region3: #{tpu_custom_call.1} parent=1 // loop_header
      %s24 = sphi 0, %s28
      %p25 = scmp.ge.s32.totalorder %s24, 4
      %s31 = sphi 0, %s50
      %s32 = sphi 0, %s46
      %s33 = sphi 0, %s42
      %s34 = sphi 0, %s31
      %s35 = sphi 0, %s32
      %s36 = sphi 0, %s33
      %s37 = sphi 0, %s34
      %s38 = sphi 0, %s35
      %s39 = sphi 0, %s36
      %s55 = sphi 0, %s57
      %s58 = sphi 0, %s55
      %s59 = sphi 0, %s58
      %s75 = sphi 0, %s59
      %s83 = sphi 0, %s85
      %s86 = sphi 0, %s83
      %s87 = sphi 0, %s86
      %s103 = sphi 0, %s87
      %s111 = sphi 0, %s113
      %s114 = sphi 0, %s111
      %s115 = sphi 0, %s114
      %s131 = sphi 0, %s115
      %s135 = sphi 0, %s135
      %s137 = sphi 0, %s135
      %s138 = sphi 0, %s137
      %s152 = sphi 0, %s138
      %s156 = sphi 0, %s156
      %s158 = sphi 0, %s156
      %s159 = sphi 0, %s158
      %s173 = sphi 0, %s159
      %s177 = sphi 0, %s177
      %s179 = sphi 0, %s177
      %s180 = sphi 0, %s179
      %s194 = sphi 0, %s180
      %s198 = sphi 0, %s198
      %s200 = sphi 0, %s198
      %s201 = sphi 0, %s200
      %s215 = sphi 0, %s201
      %s223 = sphi 0, %s225
      %s226 = sphi 0, %s223
      %s227 = sphi 0, %s226
      %s243 = sphi 0, %s227
    $region4: #{tpu_custom_call.1} parent=1 // loop_header_branch
      %27 = sbr.rel (%p25) target = $region8
    $region5: #{tpu_custom_call.1} parent=1 // loop_body
      %s29 = ssub.s32 %s24, 1
      %s30 = ssub.s32 %s24, 2
      %s40 = sadd.s32 1, %s33
      %p41 = scmp.ge.s32.totalorder %s40, 1
      %s42 = scalar_select %p41, 0, %s40
      %s43 = sadd.s32 1, %s32
      %s44 = scalar_select %p41, %s43, %s32
      %p45 = scmp.ge.s32.totalorder %s44, 1
      %s46 = scalar_select %p45, 0, %s44
      %s47 = sadd.s32 1, %s31
      %s48 = scalar_select %p45, %s47, %s31
      %p49 = scmp.ge.s32.totalorder %s48, 2
      %s50 = scalar_select %p49, 0, %s48
      %s51 = ssub.s32 %s31, %s50
      %s52 = ssub.s32 %s32, %s46
      %s53 = sor.u32 %s51, %s52
      %p54 = scmp.eq.s32.totalorder %s53, 0
      %s56 = sadd.s32 %s55, 1
      %s57 = scalar_select %p54, %s55, %s56
      %p60 = pneg %p54
      %p61 = scmp.eq.s32.totalorder %s24, 1
      %p62 = por %p60, %p61
      %p63 = scmp.ne.s32.totalorder %s55, %s58
      %p64 = scmp.eq.s32.totalorder %s24, 0
      %p65 = por %p63, %p64
      %p66 = scmp.ne.s32.totalorder %s55, %s58
      %p67 = scmp.eq.s32.totalorder %s29, 1
      %p68 = por %p66, %p67
      %p69 = scmp.ne.s32.totalorder %s58, %s59
      %p70 = scmp.eq.s32.totalorder %s29, 0
      %p71 = por %p69, %p70
      %p72 = scmp.ne.s32.totalorder %s58, %s59
      %p73 = scmp.eq.s32.totalorder %s30, 1
      %p74 = por %p72, %p73
      %p76 = scmp.ne.s32.totalorder %s59, %s75
      %p77 = scmp.eq.s32.totalorder %s30, 0
      %p78 = por %p76, %p77
      %s79 = ssub.s32 %s31, %s50
      %s80 = ssub.s32 %s33, %s42
      %s81 = sor.u32 %s79, %s80
      %p82 = scmp.eq.s32.totalorder %s81, 0
      %s84 = sadd.s32 %s83, 1
      %s85 = scalar_select %p82, %s83, %s84
      %p88 = pneg %p82
      %p89 = scmp.eq.s32.totalorder %s24, 1
      %p90 = por %p88, %p89
      %p91 = scmp.ne.s32.totalorder %s83, %s86
      %p92 = scmp.eq.s32.totalorder %s24, 0
      %p93 = por %p91, %p92
      %p94 = scmp.ne.s32.totalorder %s83, %s86
      %p95 = scmp.eq.s32.totalorder %s29, 1
      %p96 = por %p94, %p95
      %p97 = scmp.ne.s32.totalorder %s86, %s87
      %p98 = scmp.eq.s32.totalorder %s29, 0
      %p99 = por %p97, %p98
      %p100 = scmp.ne.s32.totalorder %s86, %s87
      %p101 = scmp.eq.s32.totalorder %s30, 1
      %p102 = por %p100, %p101
      %p104 = scmp.ne.s32.totalorder %s87, %s103
      %p105 = scmp.eq.s32.totalorder %s30, 0
      %p106 = por %p104, %p105
      %s107 = ssub.s32 %s31, %s50
      %s108 = ssub.s32 %s33, %s42
      %s109 = sor.u32 %s107, %s108
      %p110 = scmp.eq.s32.totalorder %s109, 0
      %s112 = sadd.s32 %s111, 1
      %s113 = scalar_select %p110, %s111, %s112
      %p116 = pneg %p110
      %p117 = scmp.eq.s32.totalorder %s24, 1
      %p118 = por %p116, %p117
      %p119 = scmp.ne.s32.totalorder %s111, %s114
      %p120 = scmp.eq.s32.totalorder %s24, 0
      %p121 = por %p119, %p120
      %p122 = scmp.ne.s32.totalorder %s111, %s114
      %p123 = scmp.eq.s32.totalorder %s29, 1
      %p124 = por %p122, %p123
      %p125 = scmp.ne.s32.totalorder %s114, %s115
      %p126 = scmp.eq.s32.totalorder %s29, 0
      %p127 = por %p125, %p126
      %p128 = scmp.ne.s32.totalorder %s114, %s115
      %p129 = scmp.eq.s32.totalorder %s30, 1
      %p130 = por %p128, %p129
      %p132 = scmp.ne.s32.totalorder %s115, %s131
      %p133 = scmp.eq.s32.totalorder %s30, 0
      %p134 = por %p132, %p133
      %s136 = sadd.s32 %s135, 1
      %p139 = scmp.eq.s32.totalorder %s24, 1
      %p140 = scmp.ne.s32.totalorder %s135, %s137
      %p141 = scmp.eq.s32.totalorder %s24, 0
      %p142 = por %p140, %p141
      %p143 = scmp.ne.s32.totalorder %s135, %s137
      %p144 = scmp.eq.s32.totalorder %s29, 1
      %p145 = por %p143, %p144
      %p146 = scmp.ne.s32.totalorder %s137, %s138
      %p147 = scmp.eq.s32.totalorder %s29, 0
      %p148 = por %p146, %p147
      %p149 = scmp.ne.s32.totalorder %s137, %s138
      %p150 = scmp.eq.s32.totalorder %s30, 1
      %p151 = por %p149, %p150
      %p153 = scmp.ne.s32.totalorder %s138, %s152
      %p154 = scmp.eq.s32.totalorder %s30, 0
      %p155 = por %p153, %p154
      %s157 = sadd.s32 %s156, 1
      %p160 = scmp.eq.s32.totalorder %s24, 1
      %p161 = scmp.ne.s32.totalorder %s156, %s158
      %p162 = scmp.eq.s32.totalorder %s24, 0
      %p163 = por %p161, %p162
      %p164 = scmp.ne.s32.totalorder %s156, %s158
      %p165 = scmp.eq.s32.totalorder %s29, 1
      %p166 = por %p164, %p165
      %p167 = scmp.ne.s32.totalorder %s158, %s159
      %p168 = scmp.eq.s32.totalorder %s29, 0
      %p169 = por %p167, %p168
      %p170 = scmp.ne.s32.totalorder %s158, %s159
      %p171 = scmp.eq.s32.totalorder %s30, 1
      %p172 = por %p170, %p171
      %p174 = scmp.ne.s32.totalorder %s159, %s173
      %p175 = scmp.eq.s32.totalorder %s30, 0
      %p176 = por %p174, %p175
      %s178 = sadd.s32 %s177, 1
      %p181 = scmp.eq.s32.totalorder %s24, 1
      %p182 = scmp.ne.s32.totalorder %s177, %s179
      %p183 = scmp.eq.s32.totalorder %s24, 0
      %p184 = por %p182, %p183
      %p185 = scmp.ne.s32.totalorder %s177, %s179
      %p186 = scmp.eq.s32.totalorder %s29, 1
      %p187 = por %p185, %p186
      %p188 = scmp.ne.s32.totalorder %s179, %s180
      %p189 = scmp.eq.s32.totalorder %s29, 0
      %p190 = por %p188, %p189
      %p191 = scmp.ne.s32.totalorder %s179, %s180
      %p192 = scmp.eq.s32.totalorder %s30, 1
      %p193 = por %p191, %p192
      %p195 = scmp.ne.s32.totalorder %s180, %s194
      %p196 = scmp.eq.s32.totalorder %s30, 0
      %p197 = por %p195, %p196
      %s199 = sadd.s32 %s198, 1
      %p202 = scmp.eq.s32.totalorder %s24, 1
      %p203 = scmp.ne.s32.totalorder %s198, %s200
      %p204 = scmp.eq.s32.totalorder %s24, 0
      %p205 = por %p203, %p204
      %p206 = scmp.ne.s32.totalorder %s198, %s200
      %p207 = scmp.eq.s32.totalorder %s29, 1
      %p208 = por %p206, %p207
      %p209 = scmp.ne.s32.totalorder %s200, %s201
      %p210 = scmp.eq.s32.totalorder %s29, 0
      %p211 = por %p209, %p210
      %p212 = scmp.ne.s32.totalorder %s200, %s201
      %p213 = scmp.eq.s32.totalorder %s30, 1
      %p214 = por %p212, %p213
      %p216 = scmp.ne.s32.totalorder %s201, %s215
      %p217 = scmp.eq.s32.totalorder %s30, 0
      %p218 = por %p216, %p217
      %s219 = ssub.s32 %s31, %s50
      %s220 = ssub.s32 %s32, %s46
      %s221 = sor.u32 %s219, %s220
      %p222 = scmp.eq.s32.totalorder %s221, 0
      %s224 = sadd.s32 %s223, 1
      %s225 = scalar_select %p222, %s223, %s224
      %p228 = pneg %p222
      %p229 = scmp.eq.s32.totalorder %s24, 1
      %p230 = por %p228, %p229
      %p231 = scmp.ne.s32.totalorder %s223, %s226
      %p232 = scmp.eq.s32.totalorder %s24, 0
      %p233 = por %p231, %p232
      %p234 = scmp.ne.s32.totalorder %s223, %s226
      %p235 = scmp.eq.s32.totalorder %s29, 1
      %p236 = por %p234, %p235
      %p237 = scmp.ne.s32.totalorder %s226, %s227
      %p238 = scmp.eq.s32.totalorder %s29, 0
      %p239 = por %p237, %p238
      %p240 = scmp.ne.s32.totalorder %s226, %s227
      %p241 = scmp.eq.s32.totalorder %s30, 1
      %p242 = por %p240, %p241
      %p244 = scmp.ne.s32.totalorder %s227, %s243
      %p245 = scmp.eq.s32.totalorder %s30, 0
      %p246 = por %p244, %p245
      %p247 = scmp.le.s32.totalorder 1, %s24
      %p248 = scmp.lt.s32.totalorder %s24, 3
      %p249 = pnand %p247, %p248
      %p250 = pneg %p249
      // Predicated region
      $region9: #{tpu_custom_call.1} parent=5 // pred_check
        _
      $region10: #{tpu_custom_call.1} parent=5 // pred_check_branch
        %252 = sbr.rel (%p249) target = $region12
      $region11: #{tpu_custom_call.1} parent=5 // pred_region
        %s253 = ssub.s32 %s24, 1
        // Predicated region
        $region13: #{tpu_custom_call.1} parent=11 // pred_check
          %p254 = pneg %p148
        $region14: #{tpu_custom_call.1} parent=11 // pred_check_branch
          %256 = sbr.rel (%p254) target = $region16
        $region15: #{tpu_custom_call.1} parent=11 // pred_region
          %258 = vsyncadd [#allocation13], 0
          %s259 = sshll.u32 %s3, 4
          %s260 = int_to_ptr.hbm [resolvable:$true] %s259
          %s261 = sshll.u32 [#allocation12], 4
          %s262 = int_to_ptr.vmem [resolvable:$true] %s261
          %267 = dma.hbm_to_vmem [thread:$0]  %s260, 512, %s262, [#allocation13], 128, 128, 8
        $region16: #{tpu_custom_call.1} parent=11 // pred_fallthru
          _
        // Predicated region
        $region17: #{tpu_custom_call.1} parent=11 // pred_check
          %p268 = pneg %p169
        $region18: #{tpu_custom_call.1} parent=11 // pred_check_branch
          %270 = sbr.rel (%p268) target = $region20
        $region19: #{tpu_custom_call.1} parent=11 // pred_region
          %272 = vsyncadd [#allocation13], 0
          %s273 = sshll.u32 %s4, 4
          %s274 = int_to_ptr.hbm [resolvable:$true] %s273
          %s275 = sshll.u32 [#allocation14], 4
          %s276 = int_to_ptr.vmem [resolvable:$true] %s275
          %281 = dma.hbm_to_vmem [thread:$0]  %s274, 512, %s276, [#allocation13], 128, 128, 8
        $region20: #{tpu_custom_call.1} parent=11 // pred_fallthru
          _
        // Predicated region
        $region21: #{tpu_custom_call.1} parent=11 // pred_check
          %p282 = pneg %p190
        $region22: #{tpu_custom_call.1} parent=11 // pred_check_branch
          %284 = sbr.rel (%p282) target = $region24
        $region23: #{tpu_custom_call.1} parent=11 // pred_region
          %286 = vsyncadd [#allocation16], 0
          %s287 = sshll.u32 %s5, 4
          %s288 = int_to_ptr.hbm [resolvable:$true] %s287
          %s289 = sshll.u32 [#allocation15], 4
          %s290 = int_to_ptr.vmem [resolvable:$true] %s289
          %295 = dma.hbm_to_vmem [thread:$0]  %s288, 512, %s290, [#allocation16], 128, 128, 8
        $region24: #{tpu_custom_call.1} parent=11 // pred_fallthru
          _
        // Predicated region
        $region25: #{tpu_custom_call.1} parent=11 // pred_check
          %p296 = pneg %p211
        $region26: #{tpu_custom_call.1} parent=11 // pred_check_branch
          %298 = sbr.rel (%p296) target = $region28
        $region27: #{tpu_custom_call.1} parent=11 // pred_region
          %300 = vsyncadd [#allocation16], 0
          %s301 = sshll.u32 %s6, 4
          %s302 = int_to_ptr.hbm [resolvable:$true] %s301
          %s303 = sshll.u32 [#allocation17], 4
          %s304 = int_to_ptr.vmem [resolvable:$true] %s303
          %309 = dma.hbm_to_vmem [thread:$0]  %s302, 512, %s304, [#allocation16], 128, 128, 8
        $region28: #{tpu_custom_call.1} parent=11 // pred_fallthru
          _
      $region12: #{tpu_custom_call.1} parent=5 // pred_fallthru
        _
      %p310 = scmp.lt.s32.totalorder %s24, 2
      // Predicated region
      $region29: #{tpu_custom_call.1} parent=5 // pred_check
        %p311 = pneg %p310
      $region30: #{tpu_custom_call.1} parent=5 // pred_check_branch
        %313 = sbr.rel (%p311) target = $region32
      $region31: #{tpu_custom_call.1} parent=5 // pred_region
        // Predicated region
        $region33: #{tpu_custom_call.1} parent=31 // pred_check
          %p314 = pneg %p65
        $region34: #{tpu_custom_call.1} parent=31 // pred_check_branch
          %316 = sbr.rel (%p314) target = $region36
        $region35: #{tpu_custom_call.1} parent=31 // pred_region
          %s317 = sand.u32 %s55, 1
          %s318 = scalar_lea.sflag [#allocation7], %s317
          %s319 = sand.u32 %s55, 1
          %s320 = smul.addr %s319, 8
          %s321 = scalar_lea.vmem [#allocation6], %s320
          %323 = vsyncadd %s318, 0
          %s324 = sadd.s32 %s32, %s31
          %s325 = smul.addr %s324, 8
          %s326 = scalar_lea.hbm %s0, %s325
          %s328 = sshll.u32 %s326, 4
          %s329 = int_to_ptr.hbm [resolvable:$true] %s328
          %s330 = sshll.u32 %s321, 4
          %s331 = int_to_ptr.vmem [resolvable:$true] %s330
          %333 = dma.hbm_to_vmem [thread:$0]  %s329, 128, %s331, %s318
        $region36: #{tpu_custom_call.1} parent=31 // pred_fallthru
          _
        // Predicated region
        $region37: #{tpu_custom_call.1} parent=31 // pred_check
          %p334 = pneg %p93
        $region38: #{tpu_custom_call.1} parent=31 // pred_check_branch
          %336 = sbr.rel (%p334) target = $region40
        $region39: #{tpu_custom_call.1} parent=31 // pred_region
          %s337 = sand.u32 %s24, 1
          %s338 = scalar_lea.sflag [#allocation10], %s337
          %s339 = sand.u32 %s83, 1
          %s340 = smul.addr %s339, 8
          %s341 = scalar_lea.vmem [#allocation9], %s340
          %343 = vsyncadd %s338, 0
          %s344 = sadd.s32 %s33, %s31
          %s345 = smul.addr %s344, 8
          %s346 = scalar_lea.hbm %s1, %s345
          %s348 = sshll.u32 %s346, 4
          %s349 = int_to_ptr.hbm [resolvable:$true] %s348
          %s350 = sshll.u32 %s341, 4
          %s351 = int_to_ptr.vmem [resolvable:$true] %s350
          %353 = dma.hbm_to_vmem [thread:$0]  %s349, 128, %s351, %s338
        $region40: #{tpu_custom_call.1} parent=31 // pred_fallthru
          _
        // Predicated region
        $region41: #{tpu_custom_call.1} parent=31 // pred_check
          %p354 = pneg %p121
        $region42: #{tpu_custom_call.1} parent=31 // pred_check_branch
          %356 = sbr.rel (%p354) target = $region44
        $region43: #{tpu_custom_call.1} parent=31 // pred_region
          %s357 = sand.u32 %s24, 1
          %s358 = scalar_lea.sflag [#allocation10], %s357
          %s359 = sand.u32 %s111, 1
          %s360 = smul.addr %s359, 8
          %s361 = scalar_lea.vmem [#allocation11], %s360
          %363 = vsyncadd %s358, 0
          %s364 = sadd.s32 %s33, %s31
          %s365 = smul.addr %s364, 8
          %s366 = scalar_lea.hbm %s2, %s365
          %s368 = sshll.u32 %s366, 4
          %s369 = int_to_ptr.hbm [resolvable:$true] %s368
          %s370 = sshll.u32 %s361, 4
          %s371 = int_to_ptr.vmem [resolvable:$true] %s370
          %373 = dma.hbm_to_vmem [thread:$0]  %s369, 128, %s371, %s358
        $region44: #{tpu_custom_call.1} parent=31 // pred_fallthru
          _
      $region32: #{tpu_custom_call.1} parent=5 // pred_fallthru
        _
      %p374 = scmp.le.s32.totalorder 1, %s24
      %p375 = scmp.lt.s32.totalorder %s24, 3
      %p376 = pnand %p374, %p375
      %p377 = pneg %p376
      // Predicated region
      $region45: #{tpu_custom_call.1} parent=5 // pred_check
        _
      $region46: #{tpu_custom_call.1} parent=5 // pred_check_branch
        %379 = sbr.rel (%p376) target = $region48
      $region47: #{tpu_custom_call.1} parent=5 // pred_region
        %s380 = ssub.s32 %s24, 1
        %s381 = sand.u32 %s58, 1
        %s382 = scalar_lea.sflag [#allocation7], %s381
        %s383 = sand.u32 %s58, 1
        %s384 = smul.addr %s383, 8
        %s385 = scalar_lea.vmem [#allocation6], %s384
        // Predicated region
        $region49: #{tpu_custom_call.1} parent=47 // pred_check
          %p386 = pneg %p71
        $region50: #{tpu_custom_call.1} parent=47 // pred_check_branch
          %388 = sbr.rel (%p386) target = $region52
        $region51: #{tpu_custom_call.1} parent=47 // pred_region
          %390 = dma.done %s382, 128
        $region52: #{tpu_custom_call.1} parent=47 // pred_fallthru
          _
        %s391 = sand.u32 %s29, 1
        %s392 = scalar_lea.sflag [#allocation10], %s391
        %s393 = sand.u32 %s86, 1
        %s394 = smul.addr %s393, 8
        %s395 = scalar_lea.vmem [#allocation9], %s394
        // Predicated region
        $region53: #{tpu_custom_call.1} parent=47 // pred_check
          %p396 = pneg %p99
        $region54: #{tpu_custom_call.1} parent=47 // pred_check_branch
          %398 = sbr.rel (%p396) target = $region56
        $region55: #{tpu_custom_call.1} parent=47 // pred_region
          %400 = dma.done %s392, 128
        $region56: #{tpu_custom_call.1} parent=47 // pred_fallthru
          _
        %s401 = sand.u32 %s29, 1
        %s402 = scalar_lea.sflag [#allocation10], %s401
        %s403 = sand.u32 %s114, 1
        %s404 = smul.addr %s403, 8
        %s405 = scalar_lea.vmem [#allocation11], %s404
        // Predicated region
        $region57: #{tpu_custom_call.1} parent=47 // pred_check
          %p406 = pneg %p127
        $region58: #{tpu_custom_call.1} parent=47 // pred_check_branch
          %408 = sbr.rel (%p406) target = $region60
        $region59: #{tpu_custom_call.1} parent=47 // pred_region
          %410 = dma.done %s402, 128
        $region60: #{tpu_custom_call.1} parent=47 // pred_fallthru
          _
        // Predicated region
        $region61: #{tpu_custom_call.1} parent=47 // pred_check
          %p411 = pneg %p148
        $region62: #{tpu_custom_call.1} parent=47 // pred_check_branch
          %413 = sbr.rel (%p411) target = $region64
        $region63: #{tpu_custom_call.1} parent=47 // pred_region
          %415 = dma.done [#allocation13], 512
        $region64: #{tpu_custom_call.1} parent=47 // pred_fallthru
          _
        // Predicated region
        $region65: #{tpu_custom_call.1} parent=47 // pred_check
          %p416 = pneg %p169
        $region66: #{tpu_custom_call.1} parent=47 // pred_check_branch
          %418 = sbr.rel (%p416) target = $region68
        $region67: #{tpu_custom_call.1} parent=47 // pred_region
          %420 = dma.done [#allocation13], 512
        $region68: #{tpu_custom_call.1} parent=47 // pred_fallthru
          _
        // Predicated region
        $region69: #{tpu_custom_call.1} parent=47 // pred_check
          %p421 = pneg %p190
        $region70: #{tpu_custom_call.1} parent=47 // pred_check_branch
          %423 = sbr.rel (%p421) target = $region72
        $region71: #{tpu_custom_call.1} parent=47 // pred_region
          %425 = dma.done [#allocation16], 512
        $region72: #{tpu_custom_call.1} parent=47 // pred_fallthru
          _
        // Predicated region
        $region73: #{tpu_custom_call.1} parent=47 // pred_check
          %p426 = pneg %p211
        $region74: #{tpu_custom_call.1} parent=47 // pred_check_branch
          %428 = sbr.rel (%p426) target = $region76
        $region75: #{tpu_custom_call.1} parent=47 // pred_region
          %430 = dma.done [#allocation16], 512
        $region76: #{tpu_custom_call.1} parent=47 // pred_fallthru
          _
        %s431 = sand.u32 %s58, 1
        %s432 = scalar_lea.sflag [#allocation7], %s431
        %s433 = sand.u32 %s58, 1
        %s434 = smul.addr %s433, 8
        %s435 = scalar_lea.vmem [#allocation6], %s434
        %p436 = pneg %p71
        %p437 = pneg %p68
        %s438 = sand.u32 %s29, 1
        %s439 = scalar_lea.sflag [#allocation10], %s438
        %s440 = sand.u32 %s86, 1
        %s441 = smul.addr %s440, 8
        %s442 = scalar_lea.vmem [#allocation9], %s441
        %p443 = pneg %p99
        %p444 = pneg %p96
        %s445 = sand.u32 %s29, 1
        %s446 = scalar_lea.sflag [#allocation10], %s445
        %s447 = sand.u32 %s114, 1
        %s448 = smul.addr %s447, 8
        %s449 = scalar_lea.vmem [#allocation11], %s448
        %p450 = pneg %p127
        %p451 = pneg %p124
        %p452 = pneg %p148
        %p453 = pneg %p145
        %p454 = pneg %p169
        %p455 = pneg %p166
        %p456 = pneg %p190
        %p457 = pneg %p187
        %p458 = pneg %p211
        %p459 = pneg %p208
        %p460 = pneg %p239
        %p461 = pneg %p236
        %s462 = sand.u32 %s226, 1
        %s463 = scalar_lea.sflag [#allocation8], %s462
        %s464 = sand.u32 %s226, 1
        %s465 = smul.addr %s464, 8
        %s466 = scalar_lea.vmem [#allocation18], %s465
        %p467 = scmp.eq.s32.totalorder %s36, 0
        // Predicated region
        $region77: #{tpu_custom_call.1} parent=47 // pred_check
          %p468 = pneg %p467
        $region78: #{tpu_custom_call.1} parent=47 // pred_check_branch
          %470 = sbr.rel (%p468) target = $region80
        $region79: #{tpu_custom_call.1} parent=47 // pred_region
          %vm471 = vcmask 7168
          %472 = vst.msk [vmem:[#allocation3] sm:$0xff] %vm471, -inf
          %473 = vst.msk [vmem:[#allocation3 + $0x8] sm:$0xff] %vm471, -inf
          %474 = vst.msk [vmem:[#allocation3 + $0x10] sm:$0xff] %vm471, -inf
          %475 = vst.msk [vmem:[#allocation3 + $0x18] sm:$0xff] %vm471, -inf
          %476 = vst.msk [vmem:[#allocation4] sm:$0xff] %vm471, 0.0
          %477 = vst.msk [vmem:[#allocation4 + $0x8] sm:$0xff] %vm471, 0.0
          %478 = vst.msk [vmem:[#allocation4 + $0x10] sm:$0xff] %vm471, 0.0
          %479 = vst.msk [vmem:[#allocation4 + $0x18] sm:$0xff] %vm471, 0.0
          %vm480 = vcmask 64512
          %481 = vst.msk [vmem:[#allocation5] sm:$0xff] %vm480, 0.0
          %482 = vst.msk [vmem:[#allocation5 + $0x8] sm:$0xff] %vm480, 0.0
          %483 = vst.msk [vmem:[#allocation5 + $0x10] sm:$0xff] %vm480, 0.0
          %484 = vst.msk [vmem:[#allocation5 + $0x18] sm:$0xff] %vm480, 0.0
          %v485 = vld [vmem:[%s385] sm:$0xff]
          %v486 = vld [vmem:[#allocation12] sm:$0xff]
          %v487 = vld [vmem:[#allocation12 + $0x8] sm:$0xff]
          %v488 = vld [vmem:[#allocation12 + $0x10] sm:$0xff]
          %v489 = vld [vmem:[#allocation12 + $0x18] sm:$0xff]
          %vm490 = vcmask 261120
          %v492 = vsel %vm490, %v485, 0
          %494 = vmatpush.msra.mxu0 0.0
          %495 = vmatpush.msra.mxu0 0.0
          %496 = vmatpush.msra.mxu0 0.0
          %497 = vmatpush.msra.mxu0 0.0
          %498 = vmatpush.msra.mxu0 0.0
          %499 = vmatpush.msra.mxu0 0.0
          %500 = vmatpush.msra.mxu0 0.0
          %501 = vmatpush.msra.mxu0 0.0
          %502 = vmatpush.msra.mxu0 0.0
          %503 = vmatpush.msra.mxu0 0.0
          %504 = vmatpush.msra.mxu0 0.0
          %505 = vmatpush.msra.mxu0 0.0
          %506 = vmatpush.msra.mxu0 %v489
          %507 = vmatpush.msra.mxu0 %v488
          %508 = vmatpush.msra.mxu0 %v487
          %509 = vmatpush.msra.mxu0 %v486
          %510 = vmatmul.f32.gmra.mxu0 %v492
          %v511 = vpop.f32.mrf.mxu0
          %v512 = vadd.f32 0.0, %v511
          %513 = vdwg.mxu0
          %514 = vst.msk [vmem:[#allocation2] sm:$0xff] %vm490, %v512
        $region80: #{tpu_custom_call.1} parent=47 // pred_fallthru
          _
        %v515 = vld [vmem:[%s395] sm:$0xff]
        %v516 = vld [vmem:[#allocation14] sm:$0xff]
        %v517 = vld [vmem:[#allocation14 + $0x8] sm:$0xff]
        %v518 = vld [vmem:[#allocation14 + $0x10] sm:$0xff]
        %v519 = vld [vmem:[#allocation14 + $0x18] sm:$0xff]
        %vm520 = vcmask 261120
        %v522 = vsel %vm520, %v515, 0
        %524 = vmatpush.msra.mxu0 0.0
        %525 = vmatpush.msra.mxu0 0.0
        %526 = vmatpush.msra.mxu0 0.0
        %527 = vmatpush.msra.mxu0 0.0
        %528 = vmatpush.msra.mxu0 0.0
        %529 = vmatpush.msra.mxu0 0.0
        %530 = vmatpush.msra.mxu0 0.0
        %531 = vmatpush.msra.mxu0 0.0
        %532 = vmatpush.msra.mxu0 0.0
        %533 = vmatpush.msra.mxu0 0.0
        %534 = vmatpush.msra.mxu0 0.0
        %535 = vmatpush.msra.mxu0 0.0
        %536 = vmatpush.msra.mxu0 %v519
        %537 = vmatpush.msra.mxu0 %v518
        %538 = vmatpush.msra.mxu0 %v517
        %539 = vmatpush.msra.mxu0 %v516
        %540 = vmatmul.f32.gmra.mxu0 %v522
        %v541 = vpop.f32.mrf.mxu0
        %v542 = vadd.f32 0.0, %v541
        %543 = vdwg.mxu0
        %v544 = vld [vmem:[%s405] sm:$0xff]
        %v545 = vld [vmem:[#allocation15] sm:$0xff]
        %v546 = vld [vmem:[#allocation15 + $0x8] sm:$0xff]
        %v547 = vld [vmem:[#allocation15 + $0x10] sm:$0xff]
        %v548 = vld [vmem:[#allocation15 + $0x18] sm:$0xff]
        %v550 = vsel %vm520, %v544, 0
        %552 = vmatpush.msra.mxu0 0.0
        %553 = vmatpush.msra.mxu0 0.0
        %554 = vmatpush.msra.mxu0 0.0
        %555 = vmatpush.msra.mxu0 0.0
        %556 = vmatpush.msra.mxu0 0.0
        %557 = vmatpush.msra.mxu0 0.0
        %558 = vmatpush.msra.mxu0 0.0
        %559 = vmatpush.msra.mxu0 0.0
        %560 = vmatpush.msra.mxu0 0.0
        %561 = vmatpush.msra.mxu0 0.0
        %562 = vmatpush.msra.mxu0 0.0
        %563 = vmatpush.msra.mxu0 0.0
        %564 = vmatpush.msra.mxu0 %v548
        %565 = vmatpush.msra.mxu0 %v547
        %566 = vmatpush.msra.mxu0 %v546
        %567 = vmatpush.msra.mxu0 %v545
        %568 = vmatmul.f32.gmra.mxu0 %v550
        %v569 = vpop.f32.mrf.mxu0
        %v570 = vadd.f32 0.0, %v569
        %571 = vdwg.mxu0
        %v572 = vld [vmem:[#allocation2] sm:$0xff]
        %vm573 = vcmask 64512
        %v575 = vsel %vm573, %v572, 0
        %v578 = vsel %vm573, %v542, 0
        %580 = vmatpush.xpose.msra.mxu0 0.0
        %581 = vmatpush.xpose.msra.mxu0 0.0
        %582 = vmatpush.xpose.msra.mxu0 0.0
        %583 = vmatpush.xpose.msra.mxu0 0.0
        %584 = vmatpush.xpose.msra.mxu0 0.0
        %585 = vmatpush.xpose.msra.mxu0 0.0
        %586 = vmatpush.xpose.msra.mxu0 0.0
        %587 = vmatpush.xpose.msra.mxu0 0.0
        %588 = vmatpush.xpose.msra.mxu0 0.0
        %589 = vmatpush.xpose.msra.mxu0 0.0
        %590 = vmatpush.xpose.msra.mxu0 0.0
        %591 = vmatpush.xpose.msra.mxu0 0.0
        %592 = vmatpush.xpose.msra.mxu0 0.0
        %593 = vmatpush.xpose.msra.mxu0 0.0
        %594 = vmatpush.xpose.msra.mxu0 0.0
        %595 = vmatpush.xpose.msra.mxu0 %v578
        %596 = vmatmul.f32.gmra.mxu0 %v575
        %v597 = vpop.f32.mrf.mxu0
        %v598 = vadd.f32 0.0, %v597
        %599 = vdwg.mxu0
        %v600 = vmul.f32 %v598, 0.35355338
        %v601 = vld [vmem:[#allocation3] sm:$0xff]
        %v602 = vsel %vm573, %v600, -inf
        %603 = vmax.xlane.f32.xlu0 %v602
        %v604 = vpop.xlane.xlu0 %603
        %v605 = vmax.f32 %v601, %v604
        %v606 = vsub.f32 %v601, %v605
        %v607 = vmul.f32 %v606, 1.442695
        %v608 = vpow.pop %v607
        %610 = vset.pattern.permute.xlu0 0
        %611 = vperm.xlu0 %610, %v605
        %v612 = vpop.permute.xlu0 %611
        %v614 = vsub.f32 %v600, %v612
        %v615 = vmul.f32 %v614, 1.442695
        %v616 = vpow.pop %v615
        %v617 = vld [vmem:[#allocation4] sm:$0xff]
        %v618 = vmul.f32 %v608, %v617
        %v619 = vsel %vm573, %v616, 0.0
        %620 = vadd.xlane.f32.xlu0 %v619
        %v621 = vpop.xlane.xlu0 %620
        %v622 = vadd.f32 %v618, %v621
        %vm623 = vcmask 7168
        %624 = vst.msk [vmem:[#allocation4] sm:$0xff] %vm623, %v622
        %v625 = vld [vmem:[#allocation5] sm:$0xff]
        %627 = vset.pattern.permute.xlu0 0
        %628 = vperm.xlu0 %627, %v608
        %v629 = vpop.permute.xlu0 %628
        %v631 = vmul.f32 %v629, %v625
        %v633 = vsel %vm573, %v616, 0
        %635 = vmatpush.msra.mxu0 0.0
        %636 = vmatpush.msra.mxu0 0.0
        %637 = vmatpush.msra.mxu0 0.0
        %638 = vmatpush.msra.mxu0 0.0
        %639 = vmatpush.msra.mxu0 0.0
        %640 = vmatpush.msra.mxu0 0.0
        %641 = vmatpush.msra.mxu0 0.0
        %642 = vmatpush.msra.mxu0 0.0
        %643 = vmatpush.msra.mxu0 0.0
        %644 = vmatpush.msra.mxu0 0.0
        %645 = vmatpush.msra.mxu0 0.0
        %646 = vmatpush.msra.mxu0 0.0
        %647 = vmatpush.msra.mxu0 0.0
        %648 = vmatpush.msra.mxu0 0.0
        %649 = vmatpush.msra.mxu0 0.0
        %650 = vmatpush.msra.mxu0 %v570
        %651 = vmatmul.f32.gmra.mxu0 %v633
        %v652 = vpop.f32.mrf.mxu0
        %v653 = vadd.f32 0.0, %v652
        %654 = vdwg.mxu0
        %v655 = vadd.f32 %v631, %v653
        %656 = vst.msk [vmem:[#allocation5] sm:$0xff] %vm573, %v655
        %657 = vst.msk [vmem:[#allocation3] sm:$0xff] %vm623, %v605
        %658 = vrot.lane.b32.xlu0 %v572, 120
        %v659 = vpop.permute.xlu0 %658
        %660 = vrot.lane.b32.xlu0 %v542, 120
        %v661 = vpop.permute.xlu0 %660
        %v662 = vsel %vm573, %v659, 0
        %v664 = vsel %vm573, %v661, 0
        %666 = vmatpush.xpose.msra.mxu0 0.0
        %667 = vmatpush.xpose.msra.mxu0 0.0
        %668 = vmatpush.xpose.msra.mxu0 0.0
        %669 = vmatpush.xpose.msra.mxu0 0.0
        %670 = vmatpush.xpose.msra.mxu0 0.0
        %671 = vmatpush.xpose.msra.mxu0 0.0
        %672 = vmatpush.xpose.msra.mxu0 0.0
        %673 = vmatpush.xpose.msra.mxu0 0.0
        %674 = vmatpush.xpose.msra.mxu0 0.0
        %675 = vmatpush.xpose.msra.mxu0 0.0
        %676 = vmatpush.xpose.msra.mxu0 0.0
        %677 = vmatpush.xpose.msra.mxu0 0.0
        %678 = vmatpush.xpose.msra.mxu0 0.0
        %679 = vmatpush.xpose.msra.mxu0 0.0
        %680 = vmatpush.xpose.msra.mxu0 0.0
        %681 = vmatpush.xpose.msra.mxu0 %v664
        %682 = vmatmul.f32.gmra.mxu0 %v662
        %v683 = vpop.f32.mrf.mxu0
        %v684 = vadd.f32 0.0, %v683
        %685 = vdwg.mxu0
        %v686 = vmul.f32 %v684, 0.35355338
        %s687 = scalar_lea.vmem [#allocation3], 8
        %v688 = vld [vmem:[%s687] sm:$0xff]
        %v689 = vsel %vm573, %v686, -inf
        %690 = vmax.xlane.f32.xlu0 %v689
        %v691 = vpop.xlane.xlu0 %690
        %v692 = vmax.f32 %v688, %v691
        %v693 = vsub.f32 %v688, %v692
        %v694 = vmul.f32 %v693, 1.442695
        %v695 = vpow.pop %v694
        %697 = vset.pattern.permute.xlu0 0
        %698 = vperm.xlu0 %697, %v692
        %v699 = vpop.permute.xlu0 %698
        %v701 = vsub.f32 %v686, %v699
        %v702 = vmul.f32 %v701, 1.442695
        %v703 = vpow.pop %v702
        %s704 = scalar_lea.vmem [#allocation4], 8
        %v705 = vld [vmem:[%s704] sm:$0xff]
        %v706 = vmul.f32 %v695, %v705
        %v707 = vsel %vm573, %v703, 0.0
        %708 = vadd.xlane.f32.xlu0 %v707
        %v709 = vpop.xlane.xlu0 %708
        %v710 = vadd.f32 %v706, %v709
        %711 = vst.msk [vmem:[%s704] sm:$0xff] %vm623, %v710
        %s712 = scalar_lea.vmem [#allocation5], 8
        %v713 = vld [vmem:[%s712] sm:$0xff]
        %715 = vset.pattern.permute.xlu0 0
        %716 = vperm.xlu0 %715, %v695
        %v717 = vpop.permute.xlu0 %716
        %v719 = vmul.f32 %v717, %v713
        %721 = vrot.lane.b32.xlu0 %v570, 120
        %v722 = vpop.permute.xlu0 %721
        %v725 = vsel %vm573, %v703, 0
        %727 = vmatpush.msra.mxu0 0.0
        %728 = vmatpush.msra.mxu0 0.0
        %729 = vmatpush.msra.mxu0 0.0
        %730 = vmatpush.msra.mxu0 0.0
        %731 = vmatpush.msra.mxu0 0.0
        %732 = vmatpush.msra.mxu0 0.0
        %733 = vmatpush.msra.mxu0 0.0
        %734 = vmatpush.msra.mxu0 0.0
        %735 = vmatpush.msra.mxu0 0.0
        %736 = vmatpush.msra.mxu0 0.0
        %737 = vmatpush.msra.mxu0 0.0
        %738 = vmatpush.msra.mxu0 0.0
        %739 = vmatpush.msra.mxu0 0.0
        %740 = vmatpush.msra.mxu0 0.0
        %741 = vmatpush.msra.mxu0 0.0
        %742 = vmatpush.msra.mxu0 %v722
        %743 = vmatmul.f32.gmra.mxu0 %v725
        %v744 = vpop.f32.mrf.mxu0
        %v745 = vadd.f32 0.0, %v744
        %746 = vdwg.mxu0
        %v747 = vadd.f32 %v719, %v745
        %748 = vst.msk [vmem:[%s712] sm:$0xff] %vm573, %v747
        %749 = vst.msk [vmem:[%s687] sm:$0xff] %vm623, %v692
        %750 = vrot.lane.b32.xlu0 %v572, 112
        %v751 = vpop.permute.xlu0 %750
        %752 = vrot.lane.b32.xlu0 %v542, 112
        %v753 = vpop.permute.xlu0 %752
        %v754 = vsel %vm573, %v751, 0
        %v756 = vsel %vm573, %v753, 0
        %758 = vmatpush.xpose.msra.mxu0 0.0
        %759 = vmatpush.xpose.msra.mxu0 0.0
        %760 = vmatpush.xpose.msra.mxu0 0.0
        %761 = vmatpush.xpose.msra.mxu0 0.0
        %762 = vmatpush.xpose.msra.mxu0 0.0
        %763 = vmatpush.xpose.msra.mxu0 0.0
        %764 = vmatpush.xpose.msra.mxu0 0.0
        %765 = vmatpush.xpose.msra.mxu0 0.0
        %766 = vmatpush.xpose.msra.mxu0 0.0
        %767 = vmatpush.xpose.msra.mxu0 0.0
        %768 = vmatpush.xpose.msra.mxu0 0.0
        %769 = vmatpush.xpose.msra.mxu0 0.0
        %770 = vmatpush.xpose.msra.mxu0 0.0
        %771 = vmatpush.xpose.msra.mxu0 0.0
        %772 = vmatpush.xpose.msra.mxu0 0.0
        %773 = vmatpush.xpose.msra.mxu0 %v756
        %774 = vmatmul.f32.gmra.mxu0 %v754
        %v775 = vpop.f32.mrf.mxu0
        %v776 = vadd.f32 0.0, %v775
        %777 = vdwg.mxu0
        %v778 = vmul.f32 %v776, 0.35355338
        %s779 = scalar_lea.vmem [#allocation3], 16
        %v780 = vld [vmem:[%s779] sm:$0xff]
        %v781 = vsel %vm573, %v778, -inf
        %782 = vmax.xlane.f32.xlu0 %v781
        %v783 = vpop.xlane.xlu0 %782
        %v784 = vmax.f32 %v780, %v783
        %v785 = vsub.f32 %v780, %v784
        %v786 = vmul.f32 %v785, 1.442695
        %v787 = vpow.pop %v786
        %789 = vset.pattern.permute.xlu0 0
        %790 = vperm.xlu0 %789, %v784
        %v791 = vpop.permute.xlu0 %790
        %v793 = vsub.f32 %v778, %v791
        %v794 = vmul.f32 %v793, 1.442695
        %v795 = vpow.pop %v794
        %s796 = scalar_lea.vmem [#allocation4], 16
        %v797 = vld [vmem:[%s796] sm:$0xff]
        %v798 = vmul.f32 %v787, %v797
        %v799 = vsel %vm573, %v795, 0.0
        %800 = vadd.xlane.f32.xlu0 %v799
        %v801 = vpop.xlane.xlu0 %800
        %v802 = vadd.f32 %v798, %v801
        %803 = vst.msk [vmem:[%s796] sm:$0xff] %vm623, %v802
        %s804 = scalar_lea.vmem [#allocation5], 16
        %v805 = vld [vmem:[%s804] sm:$0xff]
        %807 = vset.pattern.permute.xlu0 0
        %808 = vperm.xlu0 %807, %v787
        %v809 = vpop.permute.xlu0 %808
        %v811 = vmul.f32 %v809, %v805
        %812 = vrot.lane.b32.xlu0 %v570, 112
        %v813 = vpop.permute.xlu0 %812
        %v816 = vsel %vm573, %v795, 0
        %818 = vmatpush.msra.mxu0 0.0
        %819 = vmatpush.msra.mxu0 0.0
        %820 = vmatpush.msra.mxu0 0.0
        %821 = vmatpush.msra.mxu0 0.0
        %822 = vmatpush.msra.mxu0 0.0
        %823 = vmatpush.msra.mxu0 0.0
        %824 = vmatpush.msra.mxu0 0.0
        %825 = vmatpush.msra.mxu0 0.0
        %826 = vmatpush.msra.mxu0 0.0
        %827 = vmatpush.msra.mxu0 0.0
        %828 = vmatpush.msra.mxu0 0.0
        %829 = vmatpush.msra.mxu0 0.0
        %830 = vmatpush.msra.mxu0 0.0
        %831 = vmatpush.msra.mxu0 0.0
        %832 = vmatpush.msra.mxu0 0.0
        %833 = vmatpush.msra.mxu0 %v813
        %834 = vmatmul.f32.gmra.mxu0 %v816
        %v835 = vpop.f32.mrf.mxu0
        %v836 = vadd.f32 0.0, %v835
        %837 = vdwg.mxu0
        %v838 = vadd.f32 %v811, %v836
        %839 = vst.msk [vmem:[%s804] sm:$0xff] %vm573, %v838
        %840 = vst.msk [vmem:[%s779] sm:$0xff] %vm623, %v784
        %841 = vrot.lane.b32.xlu0 %v572, 104
        %v842 = vpop.permute.xlu0 %841
        %843 = vrot.lane.b32.xlu0 %v542, 104
        %v844 = vpop.permute.xlu0 %843
        %v845 = vsel %vm573, %v842, 0
        %v847 = vsel %vm573, %v844, 0
        %849 = vmatpush.xpose.msra.mxu0 0.0
        %850 = vmatpush.xpose.msra.mxu0 0.0
        %851 = vmatpush.xpose.msra.mxu0 0.0
        %852 = vmatpush.xpose.msra.mxu0 0.0
        %853 = vmatpush.xpose.msra.mxu0 0.0
        %854 = vmatpush.xpose.msra.mxu0 0.0
        %855 = vmatpush.xpose.msra.mxu0 0.0
        %856 = vmatpush.xpose.msra.mxu0 0.0
        %857 = vmatpush.xpose.msra.mxu0 0.0
        %858 = vmatpush.xpose.msra.mxu0 0.0
        %859 = vmatpush.xpose.msra.mxu0 0.0
        %860 = vmatpush.xpose.msra.mxu0 0.0
        %861 = vmatpush.xpose.msra.mxu0 0.0
        %862 = vmatpush.xpose.msra.mxu0 0.0
        %863 = vmatpush.xpose.msra.mxu0 0.0
        %864 = vmatpush.xpose.msra.mxu0 %v847
        %865 = vmatmul.f32.gmra.mxu0 %v845
        %v866 = vpop.f32.mrf.mxu0
        %v867 = vadd.f32 0.0, %v866
        %868 = vdwg.mxu0
        %v869 = vmul.f32 %v867, 0.35355338
        %s870 = scalar_lea.vmem [#allocation3], 24
        %v871 = vld [vmem:[%s870] sm:$0xff]
        %v872 = vsel %vm573, %v869, -inf
        %873 = vmax.xlane.f32.xlu0 %v872
        %v874 = vpop.xlane.xlu0 %873
        %v875 = vmax.f32 %v871, %v874
        %v876 = vsub.f32 %v871, %v875
        %v877 = vmul.f32 %v876, 1.442695
        %v878 = vpow.pop %v877
        %880 = vset.pattern.permute.xlu0 0
        %881 = vperm.xlu0 %880, %v875
        %v882 = vpop.permute.xlu0 %881
        %v884 = vsub.f32 %v869, %v882
        %v885 = vmul.f32 %v884, 1.442695
        %v886 = vpow.pop %v885
        %s887 = scalar_lea.vmem [#allocation4], 24
        %v888 = vld [vmem:[%s887] sm:$0xff]
        %v889 = vmul.f32 %v878, %v888
        %v890 = vsel %vm573, %v886, 0.0
        %891 = vadd.xlane.f32.xlu0 %v890
        %v892 = vpop.xlane.xlu0 %891
        %v893 = vadd.f32 %v889, %v892
        %894 = vst.msk [vmem:[%s887] sm:$0xff] %vm623, %v893
        %s895 = scalar_lea.vmem [#allocation5], 24
        %v896 = vld [vmem:[%s895] sm:$0xff]
        %898 = vset.pattern.permute.xlu0 0
        %899 = vperm.xlu0 %898, %v878
        %v900 = vpop.permute.xlu0 %899
        %v902 = vmul.f32 %v900, %v896
        %903 = vrot.lane.b32.xlu0 %v570, 104
        %v904 = vpop.permute.xlu0 %903
        %v907 = vsel %vm573, %v886, 0
        %909 = vmatpush.msra.mxu0 0.0
        %910 = vmatpush.msra.mxu0 0.0
        %911 = vmatpush.msra.mxu0 0.0
        %912 = vmatpush.msra.mxu0 0.0
        %913 = vmatpush.msra.mxu0 0.0
        %914 = vmatpush.msra.mxu0 0.0
        %915 = vmatpush.msra.mxu0 0.0
        %916 = vmatpush.msra.mxu0 0.0
        %917 = vmatpush.msra.mxu0 0.0
        %918 = vmatpush.msra.mxu0 0.0
        %919 = vmatpush.msra.mxu0 0.0
        %920 = vmatpush.msra.mxu0 0.0
        %921 = vmatpush.msra.mxu0 0.0
        %922 = vmatpush.msra.mxu0 0.0
        %923 = vmatpush.msra.mxu0 0.0
        %924 = vmatpush.msra.mxu0 %v904
        %925 = vmatmul.f32.gmra.mxu0 %v907
        %v926 = vpop.f32.mrf.mxu0
        %v927 = vadd.f32 0.0, %v926
        %928 = vdwg.mxu0
        %v929 = vadd.f32 %v902, %v927
        %930 = vst.msk [vmem:[%s895] sm:$0xff] %vm573, %v929
        %931 = vst.msk [vmem:[%s870] sm:$0xff] %vm623, %v875
        // Predicated region
        $region81: #{tpu_custom_call.1} parent=47 // pred_check
          %p932 = pneg %p467
        $region82: #{tpu_custom_call.1} parent=47 // pred_check_branch
          %934 = sbr.rel (%p932) target = $region84
        $region83: #{tpu_custom_call.1} parent=47 // pred_region
          %v935 = vld [vmem:[#allocation5] sm:$0xff]
          %v936 = vld [vmem:[#allocation4] sm:$0xff]
          %v937 = vrcp.pop %v936
          %939 = vset.pattern.permute.xlu0 0
          %940 = vperm.xlu0 %939, %v937
          %v941 = vpop.permute.xlu0 %940
          %v943 = vmul.f32 %v935, %v941
          %v944 = vld [vmem:[%s712] sm:$0xff]
          %v945 = vld [vmem:[%s704] sm:$0xff]
          %v946 = vrcp.pop %v945
          %948 = vset.pattern.permute.xlu0 0
          %949 = vperm.xlu0 %948, %v946
          %v950 = vpop.permute.xlu0 %949
          %v952 = vmul.f32 %v944, %v950
          %v953 = vld [vmem:[%s804] sm:$0xff]
          %v954 = vld [vmem:[%s796] sm:$0xff]
          %v955 = vrcp.pop %v954
          %957 = vset.pattern.permute.xlu0 0
          %958 = vperm.xlu0 %957, %v955
          %v959 = vpop.permute.xlu0 %958
          %v961 = vmul.f32 %v953, %v959
          %v962 = vld [vmem:[%s895] sm:$0xff]
          %v963 = vld [vmem:[%s887] sm:$0xff]
          %v964 = vrcp.pop %v963
          %966 = vset.pattern.permute.xlu0 0
          %967 = vperm.xlu0 %966, %v964
          %v968 = vpop.permute.xlu0 %967
          %v970 = vmul.f32 %v962, %v968
          %972 = vrot.lane.b32.xlu0 %v952, 8
          %v973 = vpop.permute.xlu0 %972
          %976 = vrot.lane.b32.xlu0 %v961, 16
          %v977 = vpop.permute.xlu0 %976
          %980 = vrot.lane.b32.xlu0 %v970, 24
          %v981 = vpop.permute.xlu0 %980
          %v983 = vsel %vm573, %v943, %v973
          %vm984 = vcmask 130048
          %v985 = vsel %vm984, %v983, %v977
          %vm986 = vcmask 195584
          %v987 = vsel %vm986, %v985, %v981
          %v988 = vld [vmem:[#allocation17] sm:$0xff]
          %v989 = vld [vmem:[#allocation17 + $0x8] sm:$0xff]
          %v990 = vld [vmem:[#allocation17 + $0x10] sm:$0xff]
          %v991 = vld [vmem:[#allocation17 + $0x18] sm:$0xff]
          %v993 = vsel %vm520, %v987, 0
          %995 = vmatpush.msra.mxu0 0.0
          %996 = vmatpush.msra.mxu0 0.0
          %997 = vmatpush.msra.mxu0 0.0
          %998 = vmatpush.msra.mxu0 0.0
          %999 = vmatpush.msra.mxu0 0.0
          %1000 = vmatpush.msra.mxu0 0.0
          %1001 = vmatpush.msra.mxu0 0.0
          %1002 = vmatpush.msra.mxu0 0.0
          %1003 = vmatpush.msra.mxu0 0.0
          %1004 = vmatpush.msra.mxu0 0.0
          %1005 = vmatpush.msra.mxu0 0.0
          %1006 = vmatpush.msra.mxu0 0.0
          %1007 = vmatpush.msra.mxu0 %v991
          %1008 = vmatpush.msra.mxu0 %v990
          %1009 = vmatpush.msra.mxu0 %v989
          %1010 = vmatpush.msra.mxu0 %v988
          %1011 = vmatmul.f32.gmra.mxu0 %v993
          %v1012 = vpop.f32.mrf.mxu0
          %v1013 = vadd.f32 0.0, %v1012
          %1014 = vdwg.mxu0
          %1015 = vst.msk [vmem:[%s466] sm:$0xff] %vm520, %v1013
        $region84: #{tpu_custom_call.1} parent=47 // pred_fallthru
          _
        %s1016 = sand.u32 %s226, 1
        %s1017 = scalar_lea.sflag [#allocation8], %s1016
        %s1018 = sand.u32 %s226, 1
        %s1019 = smul.addr %s1018, 8
        %s1020 = scalar_lea.vmem [#allocation18], %s1019
        // Predicated region
        $region85: #{tpu_custom_call.1} parent=47 // pred_check
          %p1021 = pneg %p236
        $region86: #{tpu_custom_call.1} parent=47 // pred_check_branch
          %1023 = sbr.rel (%p1021) target = $region88
        $region87: #{tpu_custom_call.1} parent=47 // pred_region
          %1025 = vsyncadd %s1017, 0
          %s1026 = sadd.s32 %s35, %s34
          %s1027 = smul.addr %s1026, 8
          %s1028 = scalar_lea.hbm %s7, %s1027
          %s1030 = sshll.u32 %s1020, 4
          %s1031 = int_to_ptr.vmem [resolvable:$true] %s1030
          %s1032 = sshll.u32 %s1028, 4
          %s1033 = int_to_ptr.hbm [resolvable:$true] %s1032
          %1035 = dma.vmem_to_hbm [thread:$0]  %s1031, 128, %s1033, %s1017
        $region88: #{tpu_custom_call.1} parent=47 // pred_fallthru
          _
      $region48: #{tpu_custom_call.1} parent=5 // pred_fallthru
        _
      %p1036 = scmp.le.s32.totalorder 2, %s24
      // Predicated region
      $region89: #{tpu_custom_call.1} parent=5 // pred_check
        %p1037 = pneg %p1036
      $region90: #{tpu_custom_call.1} parent=5 // pred_check_branch
        %1039 = sbr.rel (%p1037) target = $region92
      $region91: #{tpu_custom_call.1} parent=5 // pred_region
        %s1040 = ssub.s32 %s24, 2
        // Predicated region
        $region93: #{tpu_custom_call.1} parent=91 // pred_check
          %p1041 = pneg %p242
        $region94: #{tpu_custom_call.1} parent=91 // pred_check_branch
          %1043 = sbr.rel (%p1041) target = $region96
        $region95: #{tpu_custom_call.1} parent=91 // pred_region
          %s1044 = sand.u32 %s227, 1
          %s1045 = scalar_lea.sflag [#allocation8], %s1044
          %s1046 = sand.u32 %s227, 1
          %s1047 = smul.addr %s1046, 8
          %s1048 = scalar_lea.vmem [#allocation18], %s1047
          %1050 = dma.done %s1045, 128
        $region96: #{tpu_custom_call.1} parent=91 // pred_fallthru
          _
      $region92: #{tpu_custom_call.1} parent=5 // pred_fallthru
        _
    $region6: #{tpu_custom_call.1} parent=1 // loop_footer
      %s28 = sadd.s32 1, %s24
    $region7: #{tpu_custom_call.1} parent=1 // loop_footer_branch
      %23 = sbr.rel target = $region3
    $region8: #{tpu_custom_call.1} parent=1 // loop_exit
      _
    %1051 = vsyncpa [#allocation7], 1
    %s1052 = scalar_lea.sflag [#allocation7], 1
    %1053 = vsyncpa %s1052, 1
    %1054 = vsyncpa [#allocation10], 1
    %s1055 = scalar_lea.sflag [#allocation10], 1
    %1056 = vsyncpa %s1055, 1
    %1057 = vsyncpa [#allocation13], 1
    %1058 = vsyncpa [#allocation16], 1
    %1059 = vsyncpa [#allocation8], 1
    %s1060 = scalar_lea.sflag [#allocation8], 1
    %1061 = vsyncpa %s1060, 1

</llo_original>
